<compile_context>
chip_gen: v5e
topology: v5e:2x2
jax: 0.10.0
libtpu: 0.0.40
codegen_flags: <defaults>
</compile_context>

<pallas_src>
import functools

import jax
import jax.numpy as jnp
from jax.experimental import pallas as pl
from jax.experimental.pallas import tpu as pltpu


# ------------------------------ fused LSTM kernel ------------------------------
def _fused_lstm_kernel(num_layers, x_ref, *refs):
    # refs = [wih0_t, whh0_t, b0, (wcat_l, b_l) * (num_layers-1), wout_t, out]
    wih0_ref, whh0_ref, b0_ref = refs[0], refs[1], refs[2]
    deep_refs = []
    idx = 3
    for _ in range(num_layers - 1):
        deep_refs.append((refs[idx], refs[idx + 1]))
        idx += 2
    wout_ref = refs[idx]
    out_ref = refs[idx + 1]

    B, T, I = x_ref.shape
    H = whh0_ref.shape[0]
    G = 4 * H
    D = wout_ref.shape[1]

    # ---- prologue: layer-0 input projection (+ combined bias) for ALL timesteps ----
    # one MXU-friendly (B*T, I) @ (I, 4H) matmul, hoisted off the recurrent path.
    x2 = x_ref[...].reshape(B * T, I)
    xw = (jnp.dot(x2, wih0_ref[...], preferred_element_type=jnp.float32)
          + b0_ref[...]).reshape(B, T, G)

    whh0 = whh0_ref[...]                                    # (H, 4H) resident
    deep_w = [(w_ref[...], b_ref[...]) for (w_ref, b_ref) in deep_refs]
    wout = wout_ref[...]                                    # (H, d)

    # loop-invariant gate-zone mask (sigmoid on i/f/o lanes, tanh on g lanes) — hoisted
    lane = jax.lax.broadcasted_iota(jnp.int32, (B, G), 1)
    g_zone = (lane >= 2 * H) & (lane < 3 * H)

    def cell(gates, c_prev):
        # apply both nonlinearities on the full (B, 4H) vreg, then split (PyTorch i,f,g,o)
        act = jnp.where(g_zone, jnp.tanh(gates), jax.nn.sigmoid(gates))
        i = act[:, 0 * H:1 * H]
        f = act[:, 1 * H:2 * H]
        g = act[:, 2 * H:3 * H]
        o = act[:, 3 * H:4 * H]
        c_new = f * c_prev + i * g
        h_new = o * jnp.tanh(c_new)
        return h_new, c_new

    zeros_bh = jnp.zeros((B, H), jnp.float32)
    h = [zeros_bh] * num_layers        # h0 = 0
    c = [zeros_bh] * num_layers        # c0 = 0

    h_top = []
    for t in range(T):                 # fully unrolled; T is small and static
        # layer 0: input projection already precomputed, only the recurrent matmul left
        g0 = xw[:, t, :] + jnp.dot(h[0], whh0, preferred_element_type=jnp.float32)
        h[0], c[0] = cell(g0, c[0])
        # deeper layers: single fused matmul [h_below, h_prev] @ [W_ih; W_hh]^T
        for l in range(1, num_layers):
            w_cat, b_l = deep_w[l - 1]
            hcat = jnp.concatenate([h[l - 1], h[l]], axis=1)          # (B, 2H)
            gl = jnp.dot(hcat, w_cat, preferred_element_type=jnp.float32) + b_l
            h[l], c[l] = cell(gl, c[l])
        h_top.append(h[-1])

    # ---- epilogue: fused fc_out over all timesteps as one matmul, single bulk store ----
    hs = jnp.stack(h_top, axis=1).reshape(B * T, H)                   # batch-major (B*T, H)
    y = jnp.dot(hs, wout, preferred_element_type=jnp.float32)         # (B*T, d)
    out_ref[...] = y.reshape(B, T, D).astype(out_ref.dtype)


def _fused_forward(params, x):
    """x: (B, T, I) f32 (already feature-sliced / shifted). Returns (B, T, d)."""
    B, T, _ = x.shape
    D = params["wout_t"].shape[1]
    num_layers = 1 + len(params["deep"])

    operands = [x, params["wih0_t"], params["whh0_t"], params["b0"]]
    for w_cat, b in params["deep"]:
        operands += [w_cat, b]
    operands.append(params["wout_t"])

    vmem = pl.BlockSpec(memory_space=pltpu.MemorySpace.VMEM)   # whole-array resident
    return pl.pallas_call(
        functools.partial(_fused_lstm_kernel, num_layers),
        out_shape=jax.ShapeDtypeStruct((B, T, D), jnp.float32),
        in_specs=[vmem for _ in operands],
        out_specs=vmem,
    )(*operands)


# ------------------------------ parameter init ---------------------------------
def init_params(key, input_size, hidden_size, num_layers, d):
    """Deterministic init mirroring PyTorch's U(-1/sqrt(H), 1/sqrt(H)); weights are
    pre-transposed / pre-concatenated into the fused-kernel layout."""
    H = hidden_size
    k = 1.0 / float(H) ** 0.5

    def u(kk, shape):
        return jax.random.uniform(kk, shape, minval=-k, maxval=k, dtype=jnp.float32)

    keys = jax.random.split(key, 4 * num_layers + 1)
    w_ih0 = u(keys[0], (4 * H, input_size))
    w_hh0 = u(keys[1], (4 * H, H))
    b0 = u(keys[2], (4 * H,)) + u(keys[3], (4 * H,))

    deep = []
    for layer in range(1, num_layers):
        kk = keys[4 * layer:4 * layer + 4]
        w_ih = u(kk[0], (4 * H, H))
        w_hh = u(kk[1], (4 * H, H))
        b = u(kk[2], (4 * H,)) + u(kk[3], (4 * H,))
        deep.append((jnp.concatenate([w_ih.T, w_hh.T], axis=0),   # (2H, 4H) fused weight
                     b.reshape(1, 4 * H)))

    w_out = u(keys[-1], (d, H))
    return {
        "wih0_t": w_ih0.T,             # (I, 4H)
        "whh0_t": w_hh0.T,             # (H, 4H)
        "b0": b0.reshape(1, 4 * H),    # (1, 4H) combined b_ih + b_hh
        "deep": deep,                  # [( (2H,4H), (1,4H) )] for layers >= 1
        "wout_t": w_out.T,             # (H, d)
    }


# --------------------------- forward (module semantics) -------------------------
@functools.partial(jax.jit, static_argnames=("train_or_validation",))
def custom_lstm_forward(params, x_inp, *, train_or_validation):
    x = x_inp.astype(jnp.float32)
    x = x[:, :, 1:]                                  # drop the first feature column
    B, _, I = x.shape
    if train_or_validation == "train":
        # teacher forcing: shift right by one timestep, prepend a zero timestep
        x = jnp.concatenate([jnp.zeros((B, 1, I), jnp.float32), x[:, :-1, :]], axis=1)
    # h0 = c0 = 0 is realized inside the kernel.
    # TODO(synk): stateful last_h0/last_c0 carry across 'validation' calls not implemented.
    # TODO(synk): inter-layer nn.LSTM dropout omitted (deterministic forward).
    return _fused_forward(params, x)


# ------------------------------ pure-JAX reference ------------------------------
def _reference_forward(params, x_inp, train_or_validation):
    x = x_inp.astype(jnp.float32)[:, :, 1:]
    B, T, I = x.shape
    if train_or_validation == "train":
        x = jnp.concatenate([jnp.zeros((B, 1, I), jnp.float32), x[:, :-1, :]], axis=1)
    H = params["whh0_t"].shape[0]
    num_layers = 1 + len(params["deep"])

    def step(x_t, h, c, w_ih_t, w_hh_t, b):
        gates = x_t @ w_ih_t + h @ w_hh_t + b
        i = jax.nn.sigmoid(gates[:, 0 * H:1 * H])
        f = jax.nn.sigmoid(gates[:, 1 * H:2 * H])
        g = jnp.tanh(gates[:, 2 * H:3 * H])
        o = jax.nn.sigmoid(gates[:, 3 * H:4 * H])
        c_new = f * c + i * g
        return o * jnp.tanh(c_new), c_new

    h = [jnp.zeros((B, H), jnp.float32) for _ in range(num_layers)]
    c = [jnp.zeros((B, H), jnp.float32) for _ in range(num_layers)]
    outs = []
    for t in range(T):
        h[0], c[0] = step(x[:, t, :], h[0], c[0],
                          params["wih0_t"], params["whh0_t"], params["b0"])
        for l in range(1, num_layers):
            w_cat, b = params["deep"][l - 1]
            h[l], c[l] = step(h[l - 1], h[l], c[l], w_cat[:H], w_cat[H:], b)
        outs.append(h[-1])
    hs = jnp.stack(outs, axis=1)                         # (B, T, H)
    return jnp.einsum("bth,hd->btd", hs, params["wout_t"])


# ----------------------------------- main ----------------------------------------
if __name__ == "__main__":
    batch = 2
    seq = 8
    raw_features = 5          # module slices off column 0 -> input_size = 4
    input_size = raw_features - 1
    num_layers = 2
    hidden_size = 32
    d = 3

    key = jax.random.PRNGKey(0)
    pkey, xkey = jax.random.split(key)
    params = init_params(pkey, input_size, hidden_size, num_layers, d)
    x = jax.random.normal(xkey, (batch, seq, raw_features), dtype=jnp.float32)

    out = custom_lstm_forward(params, x, train_or_validation="train")
    out = jax.block_until_ready(out)
    assert out.shape == (batch, seq, d), out.shape

    ref = jax.block_until_ready(_reference_forward(params, x, "train"))
    max_err = float(jnp.max(jnp.abs(out - ref)))
    assert jnp.allclose(out, ref, atol=1e-3, rtol=1e-3), max_err

    print("KERNEL_OK")
</pallas_src>

<mosaic_0001>
module attributes {stable_mosaic.version = 11 : i64} {
  func.func @_fused_lstm_kernel(%arg0: memref<2x8x4xf32, #tpu.memory_space<vmem>>, %arg1: memref<4x128xf32, #tpu.memory_space<vmem>>, %arg2: memref<32x128xf32, #tpu.memory_space<vmem>>, %arg3: memref<1x128xf32, #tpu.memory_space<vmem>>, %arg4: memref<64x128xf32, #tpu.memory_space<vmem>>, %arg5: memref<1x128xf32, #tpu.memory_space<vmem>>, %arg6: memref<32x3xf32, #tpu.memory_space<vmem>>, %arg7: memref<2x8x3xf32, #tpu.memory_space<vmem>>) attributes {dimension_semantics = [], scalar_prefetch = 0 : i64, scratch_operands = 0 : i64, tpu.core_type = #tpu.core_type<tc>} {
    %c0 = arith.constant 0 : index
    %c0_0 = arith.constant 0 : index
    %c0_1 = arith.constant 0 : index
    %0 = vector.load %arg0[%c0, %c0_0, %c0_1] : memref<2x8x4xf32, #tpu.memory_space<vmem>>, vector<2x8x4xf32>
    %1 = vector.shape_cast %0 : vector<2x8x4xf32> to vector<16x4xf32>
    %c0_2 = arith.constant 0 : index
    %c0_3 = arith.constant 0 : index
    %2 = vector.load %arg1[%c0_2, %c0_3] : memref<4x128xf32, #tpu.memory_space<vmem>>, vector<4x128xf32>
    %cst = arith.constant dense<0.000000e+00> : vector<16x128xf32>
    %3 = tpu.matmul %1, %2, %cst {dimension_numbers = #tpu.dot_dimension_numbers<[1], [0], [0], [1], [0, 0, 1, 1], [], []>} : vector<16x4xf32>, vector<4x128xf32>, vector<16x128xf32> -> vector<16x128xf32>
    %c0_4 = arith.constant 0 : index
    %c0_5 = arith.constant 0 : index
    %4 = vector.load %arg3[%c0_4, %c0_5] : memref<1x128xf32, #tpu.memory_space<vmem>>, vector<1x128xf32>
    %5 = vector.broadcast %4 : vector<1x128xf32> to vector<16x128xf32>
    %6 = arith.addf %3, %5 : vector<16x128xf32>
    %7 = vector.shape_cast %6 : vector<16x128xf32> to vector<2x8x128xf32>
    %c0_6 = arith.constant 0 : index
    %c0_7 = arith.constant 0 : index
    %8 = vector.load %arg2[%c0_6, %c0_7] : memref<32x128xf32, #tpu.memory_space<vmem>>, vector<32x128xf32>
    %c0_8 = arith.constant 0 : index
    %c0_9 = arith.constant 0 : index
    %9 = vector.load %arg4[%c0_8, %c0_9] : memref<64x128xf32, #tpu.memory_space<vmem>>, vector<64x128xf32>
    %c0_10 = arith.constant 0 : index
    %c0_11 = arith.constant 0 : index
    %10 = vector.load %arg5[%c0_10, %c0_11] : memref<1x128xf32, #tpu.memory_space<vmem>>, vector<1x128xf32>
    %c0_12 = arith.constant 0 : index
    %c0_13 = arith.constant 0 : index
    %11 = vector.load %arg6[%c0_12, %c0_13] : memref<32x3xf32, #tpu.memory_space<vmem>>, vector<32x3xf32>
    %12 = tpu.iota {dimensions = array<i32: 1>} : vector<2x128xi32>
    %c64_i32 = arith.constant 64 : i32
    %13 = vector.broadcast %c64_i32 : i32 to vector<2x128xi32>
    %14 = arith.cmpi sge, %12, %13 : vector<2x128xi32>
    %c96_i32 = arith.constant 96 : i32
    %15 = vector.broadcast %c96_i32 : i32 to vector<2x128xi32>
    %16 = arith.cmpi slt, %12, %15 : vector<2x128xi32>
    %17 = arith.andi %14, %16 : vector<2x128xi1>
    %cst_14 = arith.constant 0.000000e+00 : f32
    %18 = vector.broadcast %cst_14 : f32 to vector<2x32xf32>
    %19 = vector.extract_strided_slice %7 {offsets = [0, 0, 0], sizes = [2, 1, 128], strides = [1, 1, 1]} : vector<2x8x128xf32> to vector<2x1x128xf32>
    %20 = vector.shape_cast %19 : vector<2x1x128xf32> to vector<2x128xf32>
    %cst_15 = arith.constant dense<0.000000e+00> : vector<2x128xf32>
    %21 = tpu.matmul %18, %8, %cst_15 {dimension_numbers = #tpu.dot_dimension_numbers<[1], [0], [0], [1], [0, 0, 1, 1], [], []>} : vector<2x32xf32>, vector<32x128xf32>, vector<2x128xf32> -> vector<2x128xf32>
    %22 = arith.addf %20, %21 : vector<2x128xf32>
    %23 = math.tanh %22 : vector<2x128xf32>
    %24 = arith.negf %22 : vector<2x128xf32>
    %25 = math.exp %24 : vector<2x128xf32>
    %cst_16 = arith.constant 1.000000e+00 : f32
    %26 = vector.broadcast %cst_16 : f32 to vector<2x128xf32>
    %27 = arith.addf %26, %25 : vector<2x128xf32>
    %28 = arith.divf %26, %27 : vector<2x128xf32>
    %29 = arith.select %17, %23, %28 : vector<2x128xi1>, vector<2x128xf32>
    %30 = vector.extract_strided_slice %29 {offsets = [0, 0], sizes = [2, 32], strides = [1, 1]} : vector<2x128xf32> to vector<2x32xf32>
    %31 = vector.extract_strided_slice %29 {offsets = [0, 32], sizes = [2, 32], strides = [1, 1]} : vector<2x128xf32> to vector<2x32xf32>
    %32 = vector.extract_strided_slice %29 {offsets = [0, 64], sizes = [2, 32], strides = [1, 1]} : vector<2x128xf32> to vector<2x32xf32>
    %33 = vector.extract_strided_slice %29 {offsets = [0, 96], sizes = [2, 32], strides = [1, 1]} : vector<2x128xf32> to vector<2x32xf32>
    %34 = arith.mulf %31, %18 : vector<2x32xf32>
    %35 = arith.mulf %30, %32 : vector<2x32xf32>
    %36 = arith.addf %34, %35 : vector<2x32xf32>
    %37 = math.tanh %36 : vector<2x32xf32>
    %38 = arith.mulf %33, %37 : vector<2x32xf32>
    %39 = tpu.concatenate %38, %18 in 1 : vector<2x32xf32>, vector<2x32xf32> -> vector<2x64xf32>
    %cst_17 = arith.constant dense<0.000000e+00> : vector<2x128xf32>
    %40 = tpu.matmul %39, %9, %cst_17 {dimension_numbers = #tpu.dot_dimension_numbers<[1], [0], [0], [1], [0, 0, 1, 1], [], []>} : vector<2x64xf32>, vector<64x128xf32>, vector<2x128xf32> -> vector<2x128xf32>
    %41 = vector.broadcast %10 : vector<1x128xf32> to vector<2x128xf32>
    %42 = arith.addf %40, %41 : vector<2x128xf32>
    %43 = math.tanh %42 : vector<2x128xf32>
    %44 = arith.negf %42 : vector<2x128xf32>
    %45 = math.exp %44 : vector<2x128xf32>
    %cst_18 = arith.constant 1.000000e+00 : f32
    %46 = vector.broadcast %cst_18 : f32 to vector<2x128xf32>
    %47 = arith.addf %46, %45 : vector<2x128xf32>
    %48 = arith.divf %46, %47 : vector<2x128xf32>
    %49 = arith.select %17, %43, %48 : vector<2x128xi1>, vector<2x128xf32>
    %50 = vector.extract_strided_slice %49 {offsets = [0, 0], sizes = [2, 32], strides = [1, 1]} : vector<2x128xf32> to vector<2x32xf32>
    %51 = vector.extract_strided_slice %49 {offsets = [0, 32], sizes = [2, 32], strides = [1, 1]} : vector<2x128xf32> to vector<2x32xf32>
    %52 = vector.extract_strided_slice %49 {offsets = [0, 64], sizes = [2, 32], strides = [1, 1]} : vector<2x128xf32> to vector<2x32xf32>
    %53 = vector.extract_strided_slice %49 {offsets = [0, 96], sizes = [2, 32], strides = [1, 1]} : vector<2x128xf32> to vector<2x32xf32>
    %54 = arith.mulf %51, %18 : vector<2x32xf32>
    %55 = arith.mulf %50, %52 : vector<2x32xf32>
    %56 = arith.addf %54, %55 : vector<2x32xf32>
    %57 = math.tanh %56 : vector<2x32xf32>
    %58 = arith.mulf %53, %57 : vector<2x32xf32>
    %59 = vector.extract_strided_slice %7 {offsets = [0, 1, 0], sizes = [2, 1, 128], strides = [1, 1, 1]} : vector<2x8x128xf32> to vector<2x1x128xf32>
    %60 = vector.shape_cast %59 : vector<2x1x128xf32> to vector<2x128xf32>
    %cst_19 = arith.constant dense<0.000000e+00> : vector<2x128xf32>
    %61 = tpu.matmul %38, %8, %cst_19 {dimension_numbers = #tpu.dot_dimension_numbers<[1], [0], [0], [1], [0, 0, 1, 1], [], []>} : vector<2x32xf32>, vector<32x128xf32>, vector<2x128xf32> -> vector<2x128xf32>
    %62 = arith.addf %60, %61 : vector<2x128xf32>
    %63 = math.tanh %62 : vector<2x128xf32>
    %64 = arith.negf %62 : vector<2x128xf32>
    %65 = math.exp %64 : vector<2x128xf32>
    %cst_20 = arith.constant 1.000000e+00 : f32
    %66 = vector.broadcast %cst_20 : f32 to vector<2x128xf32>
    %67 = arith.addf %66, %65 : vector<2x128xf32>
    %68 = arith.divf %66, %67 : vector<2x128xf32>
    %69 = arith.select %17, %63, %68 : vector<2x128xi1>, vector<2x128xf32>
    %70 = vector.extract_strided_slice %69 {offsets = [0, 0], sizes = [2, 32], strides = [1, 1]} : vector<2x128xf32> to vector<2x32xf32>
    %71 = vector.extract_strided_slice %69 {offsets = [0, 32], sizes = [2, 32], strides = [1, 1]} : vector<2x128xf32> to vector<2x32xf32>
    %72 = vector.extract_strided_slice %69 {offsets = [0, 64], sizes = [2, 32], strides = [1, 1]} : vector<2x128xf32> to vector<2x32xf32>
    %73 = vector.extract_strided_slice %69 {offsets = [0, 96], sizes = [2, 32], strides = [1, 1]} : vector<2x128xf32> to vector<2x32xf32>
    %74 = arith.mulf %71, %36 : vector<2x32xf32>
    %75 = arith.mulf %70, %72 : vector<2x32xf32>
    %76 = arith.addf %74, %75 : vector<2x32xf32>
    %77 = math.tanh %76 : vector<2x32xf32>
    %78 = arith.mulf %73, %77 : vector<2x32xf32>
    %79 = tpu.concatenate %78, %58 in 1 : vector<2x32xf32>, vector<2x32xf32> -> vector<2x64xf32>
    %cst_21 = arith.constant dense<0.000000e+00> : vector<2x128xf32>
    %80 = tpu.matmul %79, %9, %cst_21 {dimension_numbers = #tpu.dot_dimension_numbers<[1], [0], [0], [1], [0, 0, 1, 1], [], []>} : vector<2x64xf32>, vector<64x128xf32>, vector<2x128xf32> -> vector<2x128xf32>
    %81 = vector.broadcast %10 : vector<1x128xf32> to vector<2x128xf32>
    %82 = arith.addf %80, %81 : vector<2x128xf32>
    %83 = math.tanh %82 : vector<2x128xf32>
    %84 = arith.negf %82 : vector<2x128xf32>
    %85 = math.exp %84 : vector<2x128xf32>
    %cst_22 = arith.constant 1.000000e+00 : f32
    %86 = vector.broadcast %cst_22 : f32 to vector<2x128xf32>
    %87 = arith.addf %86, %85 : vector<2x128xf32>
    %88 = arith.divf %86, %87 : vector<2x128xf32>
    %89 = arith.select %17, %83, %88 : vector<2x128xi1>, vector<2x128xf32>
    %90 = vector.extract_strided_slice %89 {offsets = [0, 0], sizes = [2, 32], strides = [1, 1]} : vector<2x128xf32> to vector<2x32xf32>
    %91 = vector.extract_strided_slice %89 {offsets = [0, 32], sizes = [2, 32], strides = [1, 1]} : vector<2x128xf32> to vector<2x32xf32>
    %92 = vector.extract_strided_slice %89 {offsets = [0, 64], sizes = [2, 32], strides = [1, 1]} : vector<2x128xf32> to vector<2x32xf32>
    %93 = vector.extract_strided_slice %89 {offsets = [0, 96], sizes = [2, 32], strides = [1, 1]} : vector<2x128xf32> to vector<2x32xf32>
    %94 = arith.mulf %91, %56 : vector<2x32xf32>
    %95 = arith.mulf %90, %92 : vector<2x32xf32>
    %96 = arith.addf %94, %95 : vector<2x32xf32>
    %97 = math.tanh %96 : vector<2x32xf32>
    %98 = arith.mulf %93, %97 : vector<2x32xf32>
    %99 = vector.extract_strided_slice %7 {offsets = [0, 2, 0], sizes = [2, 1, 128], strides = [1, 1, 1]} : vector<2x8x128xf32> to vector<2x1x128xf32>
    %100 = vector.shape_cast %99 : vector<2x1x128xf32> to vector<2x128xf32>
    %cst_23 = arith.constant dense<0.000000e+00> : vector<2x128xf32>
    %101 = tpu.matmul %78, %8, %cst_23 {dimension_numbers = #tpu.dot_dimension_numbers<[1], [0], [0], [1], [0, 0, 1, 1], [], []>} : vector<2x32xf32>, vector<32x128xf32>, vector<2x128xf32> -> vector<2x128xf32>
    %102 = arith.addf %100, %101 : vector<2x128xf32>
    %103 = math.tanh %102 : vector<2x128xf32>
    %104 = arith.negf %102 : vector<2x128xf32>
    %105 = math.exp %104 : vector<2x128xf32>
    %cst_24 = arith.constant 1.000000e+00 : f32
    %106 = vector.broadcast %cst_24 : f32 to vector<2x128xf32>
    %107 = arith.addf %106, %105 : vector<2x128xf32>
    %108 = arith.divf %106, %107 : vector<2x128xf32>
    %109 = arith.select %17, %103, %108 : vector<2x128xi1>, vector<2x128xf32>
    %110 = vector.extract_strided_slice %109 {offsets = [0, 0], sizes = [2, 32], strides = [1, 1]} : vector<2x128xf32> to vector<2x32xf32>
    %111 = vector.extract_strided_slice %109 {offsets = [0, 32], sizes = [2, 32], strides = [1, 1]} : vector<2x128xf32> to vector<2x32xf32>
    %112 = vector.extract_strided_slice %109 {offsets = [0, 64], sizes = [2, 32], strides = [1, 1]} : vector<2x128xf32> to vector<2x32xf32>
    %113 = vector.extract_strided_slice %109 {offsets = [0, 96], sizes = [2, 32], strides = [1, 1]} : vector<2x128xf32> to vector<2x32xf32>
    %114 = arith.mulf %111, %76 : vector<2x32xf32>
    %115 = arith.mulf %110, %112 : vector<2x32xf32>
    %116 = arith.addf %114, %115 : vector<2x32xf32>
    %117 = math.tanh %116 : vector<2x32xf32>
    %118 = arith.mulf %113, %117 : vector<2x32xf32>
    %119 = tpu.concatenate %118, %98 in 1 : vector<2x32xf32>, vector<2x32xf32> -> vector<2x64xf32>
    %cst_25 = arith.constant dense<0.000000e+00> : vector<2x128xf32>
    %120 = tpu.matmul %119, %9, %cst_25 {dimension_numbers = #tpu.dot_dimension_numbers<[1], [0], [0], [1], [0, 0, 1, 1], [], []>} : vector<2x64xf32>, vector<64x128xf32>, vector<2x128xf32> -> vector<2x128xf32>
    %121 = vector.broadcast %10 : vector<1x128xf32> to vector<2x128xf32>
    %122 = arith.addf %120, %121 : vector<2x128xf32>
    %123 = math.tanh %122 : vector<2x128xf32>
    %124 = arith.negf %122 : vector<2x128xf32>
    %125 = math.exp %124 : vector<2x128xf32>
    %cst_26 = arith.constant 1.000000e+00 : f32
    %126 = vector.broadcast %cst_26 : f32 to vector<2x128xf32>
    %127 = arith.addf %126, %125 : vector<2x128xf32>
    %128 = arith.divf %126, %127 : vector<2x128xf32>
    %129 = arith.select %17, %123, %128 : vector<2x128xi1>, vector<2x128xf32>
    %130 = vector.extract_strided_slice %129 {offsets = [0, 0], sizes = [2, 32], strides = [1, 1]} : vector<2x128xf32> to vector<2x32xf32>
    %131 = vector.extract_strided_slice %129 {offsets = [0, 32], sizes = [2, 32], strides = [1, 1]} : vector<2x128xf32> to vector<2x32xf32>
    %132 = vector.extract_strided_slice %129 {offsets = [0, 64], sizes = [2, 32], strides = [1, 1]} : vector<2x128xf32> to vector<2x32xf32>
    %133 = vector.extract_strided_slice %129 {offsets = [0, 96], sizes = [2, 32], strides = [1, 1]} : vector<2x128xf32> to vector<2x32xf32>
    %134 = arith.mulf %131, %96 : vector<2x32xf32>
    %135 = arith.mulf %130, %132 : vector<2x32xf32>
    %136 = arith.addf %134, %135 : vector<2x32xf32>
    %137 = math.tanh %136 : vector<2x32xf32>
    %138 = arith.mulf %133, %137 : vector<2x32xf32>
    %139 = vector.extract_strided_slice %7 {offsets = [0, 3, 0], sizes = [2, 1, 128], strides = [1, 1, 1]} : vector<2x8x128xf32> to vector<2x1x128xf32>
    %140 = vector.shape_cast %139 : vector<2x1x128xf32> to vector<2x128xf32>
    %cst_27 = arith.constant dense<0.000000e+00> : vector<2x128xf32>
    %141 = tpu.matmul %118, %8, %cst_27 {dimension_numbers = #tpu.dot_dimension_numbers<[1], [0], [0], [1], [0, 0, 1, 1], [], []>} : vector<2x32xf32>, vector<32x128xf32>, vector<2x128xf32> -> vector<2x128xf32>
    %142 = arith.addf %140, %141 : vector<2x128xf32>
    %143 = math.tanh %142 : vector<2x128xf32>
    %144 = arith.negf %142 : vector<2x128xf32>
    %145 = math.exp %144 : vector<2x128xf32>
    %cst_28 = arith.constant 1.000000e+00 : f32
    %146 = vector.broadcast %cst_28 : f32 to vector<2x128xf32>
    %147 = arith.addf %146, %145 : vector<2x128xf32>
    %148 = arith.divf %146, %147 : vector<2x128xf32>
    %149 = arith.select %17, %143, %148 : vector<2x128xi1>, vector<2x128xf32>
    %150 = vector.extract_strided_slice %149 {offsets = [0, 0], sizes = [2, 32], strides = [1, 1]} : vector<2x128xf32> to vector<2x32xf32>
    %151 = vector.extract_strided_slice %149 {offsets = [0, 32], sizes = [2, 32], strides = [1, 1]} : vector<2x128xf32> to vector<2x32xf32>
    %152 = vector.extract_strided_slice %149 {offsets = [0, 64], sizes = [2, 32], strides = [1, 1]} : vector<2x128xf32> to vector<2x32xf32>
    %153 = vector.extract_strided_slice %149 {offsets = [0, 96], sizes = [2, 32], strides = [1, 1]} : vector<2x128xf32> to vector<2x32xf32>
    %154 = arith.mulf %151, %116 : vector<2x32xf32>
    %155 = arith.mulf %150, %152 : vector<2x32xf32>
    %156 = arith.addf %154, %155 : vector<2x32xf32>
    %157 = math.tanh %156 : vector<2x32xf32>
    %158 = arith.mulf %153, %157 : vector<2x32xf32>
    %159 = tpu.concatenate %158, %138 in 1 : vector<2x32xf32>, vector<2x32xf32> -> vector<2x64xf32>
    %cst_29 = arith.constant dense<0.000000e+00> : vector<2x128xf32>
    %160 = tpu.matmul %159, %9, %cst_29 {dimension_numbers = #tpu.dot_dimension_numbers<[1], [0], [0], [1], [0, 0, 1, 1], [], []>} : vector<2x64xf32>, vector<64x128xf32>, vector<2x128xf32> -> vector<2x128xf32>
    %161 = vector.broadcast %10 : vector<1x128xf32> to vector<2x128xf32>
    %162 = arith.addf %160, %161 : vector<2x128xf32>
    %163 = math.tanh %162 : vector<2x128xf32>
    %164 = arith.negf %162 : vector<2x128xf32>
    %165 = math.exp %164 : vector<2x128xf32>
    %cst_30 = arith.constant 1.000000e+00 : f32
    %166 = vector.broadcast %cst_30 : f32 to vector<2x128xf32>
    %167 = arith.addf %166, %165 : vector<2x128xf32>
    %168 = arith.divf %166, %167 : vector<2x128xf32>
    %169 = arith.select %17, %163, %168 : vector<2x128xi1>, vector<2x128xf32>
    %170 = vector.extract_strided_slice %169 {offsets = [0, 0], sizes = [2, 32], strides = [1, 1]} : vector<2x128xf32> to vector<2x32xf32>
    %171 = vector.extract_strided_slice %169 {offsets = [0, 32], sizes = [2, 32], strides = [1, 1]} : vector<2x128xf32> to vector<2x32xf32>
    %172 = vector.extract_strided_slice %169 {offsets = [0, 64], sizes = [2, 32], strides = [1, 1]} : vector<2x128xf32> to vector<2x32xf32>
    %173 = vector.extract_strided_slice %169 {offsets = [0, 96], sizes = [2, 32], strides = [1, 1]} : vector<2x128xf32> to vector<2x32xf32>
    %174 = arith.mulf %171, %136 : vector<2x32xf32>
    %175 = arith.mulf %170, %172 : vector<2x32xf32>
    %176 = arith.addf %174, %175 : vector<2x32xf32>
    %177 = math.tanh %176 : vector<2x32xf32>
    %178 = arith.mulf %173, %177 : vector<2x32xf32>
    %179 = vector.extract_strided_slice %7 {offsets = [0, 4, 0], sizes = [2, 1, 128], strides = [1, 1, 1]} : vector<2x8x128xf32> to vector<2x1x128xf32>
    %180 = vector.shape_cast %179 : vector<2x1x128xf32> to vector<2x128xf32>
    %cst_31 = arith.constant dense<0.000000e+00> : vector<2x128xf32>
    %181 = tpu.matmul %158, %8, %cst_31 {dimension_numbers = #tpu.dot_dimension_numbers<[1], [0], [0], [1], [0, 0, 1, 1], [], []>} : vector<2x32xf32>, vector<32x128xf32>, vector<2x128xf32> -> vector<2x128xf32>
    %182 = arith.addf %180, %181 : vector<2x128xf32>
    %183 = math.tanh %182 : vector<2x128xf32>
    %184 = arith.negf %182 : vector<2x128xf32>
    %185 = math.exp %184 : vector<2x128xf32>
    %cst_32 = arith.constant 1.000000e+00 : f32
    %186 = vector.broadcast %cst_32 : f32 to vector<2x128xf32>
    %187 = arith.addf %186, %185 : vector<2x128xf32>
    %188 = arith.divf %186, %187 : vector<2x128xf32>
    %189 = arith.select %17, %183, %188 : vector<2x128xi1>, vector<2x128xf32>
    %190 = vector.extract_strided_slice %189 {offsets = [0, 0], sizes = [2, 32], strides = [1, 1]} : vector<2x128xf32> to vector<2x32xf32>
    %191 = vector.extract_strided_slice %189 {offsets = [0, 32], sizes = [2, 32], strides = [1, 1]} : vector<2x128xf32> to vector<2x32xf32>
    %192 = vector.extract_strided_slice %189 {offsets = [0, 64], sizes = [2, 32], strides = [1, 1]} : vector<2x128xf32> to vector<2x32xf32>
    %193 = vector.extract_strided_slice %189 {offsets = [0, 96], sizes = [2, 32], strides = [1, 1]} : vector<2x128xf32> to vector<2x32xf32>
    %194 = arith.mulf %191, %156 : vector<2x32xf32>
    %195 = arith.mulf %190, %192 : vector<2x32xf32>
    %196 = arith.addf %194, %195 : vector<2x32xf32>
    %197 = math.tanh %196 : vector<2x32xf32>
    %198 = arith.mulf %193, %197 : vector<2x32xf32>
    %199 = tpu.concatenate %198, %178 in 1 : vector<2x32xf32>, vector<2x32xf32> -> vector<2x64xf32>
    %cst_33 = arith.constant dense<0.000000e+00> : vector<2x128xf32>
    %200 = tpu.matmul %199, %9, %cst_33 {dimension_numbers = #tpu.dot_dimension_numbers<[1], [0], [0], [1], [0, 0, 1, 1], [], []>} : vector<2x64xf32>, vector<64x128xf32>, vector<2x128xf32> -> vector<2x128xf32>
    %201 = vector.broadcast %10 : vector<1x128xf32> to vector<2x128xf32>
    %202 = arith.addf %200, %201 : vector<2x128xf32>
    %203 = math.tanh %202 : vector<2x128xf32>
    %204 = arith.negf %202 : vector<2x128xf32>
    %205 = math.exp %204 : vector<2x128xf32>
    %cst_34 = arith.constant 1.000000e+00 : f32
    %206 = vector.broadcast %cst_34 : f32 to vector<2x128xf32>
    %207 = arith.addf %206, %205 : vector<2x128xf32>
    %208 = arith.divf %206, %207 : vector<2x128xf32>
    %209 = arith.select %17, %203, %208 : vector<2x128xi1>, vector<2x128xf32>
    %210 = vector.extract_strided_slice %209 {offsets = [0, 0], sizes = [2, 32], strides = [1, 1]} : vector<2x128xf32> to vector<2x32xf32>
    %211 = vector.extract_strided_slice %209 {offsets = [0, 32], sizes = [2, 32], strides = [1, 1]} : vector<2x128xf32> to vector<2x32xf32>
    %212 = vector.extract_strided_slice %209 {offsets = [0, 64], sizes = [2, 32], strides = [1, 1]} : vector<2x128xf32> to vector<2x32xf32>
    %213 = vector.extract_strided_slice %209 {offsets = [0, 96], sizes = [2, 32], strides = [1, 1]} : vector<2x128xf32> to vector<2x32xf32>
    %214 = arith.mulf %211, %176 : vector<2x32xf32>
    %215 = arith.mulf %210, %212 : vector<2x32xf32>
    %216 = arith.addf %214, %215 : vector<2x32xf32>
    %217 = math.tanh %216 : vector<2x32xf32>
    %218 = arith.mulf %213, %217 : vector<2x32xf32>
    %219 = vector.extract_strided_slice %7 {offsets = [0, 5, 0], sizes = [2, 1, 128], strides = [1, 1, 1]} : vector<2x8x128xf32> to vector<2x1x128xf32>
    %220 = vector.shape_cast %219 : vector<2x1x128xf32> to vector<2x128xf32>
    %cst_35 = arith.constant dense<0.000000e+00> : vector<2x128xf32>
    %221 = tpu.matmul %198, %8, %cst_35 {dimension_numbers = #tpu.dot_dimension_numbers<[1], [0], [0], [1], [0, 0, 1, 1], [], []>} : vector<2x32xf32>, vector<32x128xf32>, vector<2x128xf32> -> vector<2x128xf32>
    %222 = arith.addf %220, %221 : vector<2x128xf32>
    %223 = math.tanh %222 : vector<2x128xf32>
    %224 = arith.negf %222 : vector<2x128xf32>
    %225 = math.exp %224 : vector<2x128xf32>
    %cst_36 = arith.constant 1.000000e+00 : f32
    %226 = vector.broadcast %cst_36 : f32 to vector<2x128xf32>
    %227 = arith.addf %226, %225 : vector<2x128xf32>
    %228 = arith.divf %226, %227 : vector<2x128xf32>
    %229 = arith.select %17, %223, %228 : vector<2x128xi1>, vector<2x128xf32>
    %230 = vector.extract_strided_slice %229 {offsets = [0, 0], sizes = [2, 32], strides = [1, 1]} : vector<2x128xf32> to vector<2x32xf32>
    %231 = vector.extract_strided_slice %229 {offsets = [0, 32], sizes = [2, 32], strides = [1, 1]} : vector<2x128xf32> to vector<2x32xf32>
    %232 = vector.extract_strided_slice %229 {offsets = [0, 64], sizes = [2, 32], strides = [1, 1]} : vector<2x128xf32> to vector<2x32xf32>
    %233 = vector.extract_strided_slice %229 {offsets = [0, 96], sizes = [2, 32], strides = [1, 1]} : vector<2x128xf32> to vector<2x32xf32>
    %234 = arith.mulf %231, %196 : vector<2x32xf32>
    %235 = arith.mulf %230, %232 : vector<2x32xf32>
    %236 = arith.addf %234, %235 : vector<2x32xf32>
    %237 = math.tanh %236 : vector<2x32xf32>
    %238 = arith.mulf %233, %237 : vector<2x32xf32>
    %239 = tpu.concatenate %238, %218 in 1 : vector<2x32xf32>, vector<2x32xf32> -> vector<2x64xf32>
    %cst_37 = arith.constant dense<0.000000e+00> : vector<2x128xf32>
    %240 = tpu.matmul %239, %9, %cst_37 {dimension_numbers = #tpu.dot_dimension_numbers<[1], [0], [0], [1], [0, 0, 1, 1], [], []>} : vector<2x64xf32>, vector<64x128xf32>, vector<2x128xf32> -> vector<2x128xf32>
    %241 = vector.broadcast %10 : vector<1x128xf32> to vector<2x128xf32>
    %242 = arith.addf %240, %241 : vector<2x128xf32>
    %243 = math.tanh %242 : vector<2x128xf32>
    %244 = arith.negf %242 : vector<2x128xf32>
    %245 = math.exp %244 : vector<2x128xf32>
    %cst_38 = arith.constant 1.000000e+00 : f32
    %246 = vector.broadcast %cst_38 : f32 to vector<2x128xf32>
    %247 = arith.addf %246, %245 : vector<2x128xf32>
    %248 = arith.divf %246, %247 : vector<2x128xf32>
    %249 = arith.select %17, %243, %248 : vector<2x128xi1>, vector<2x128xf32>
    %250 = vector.extract_strided_slice %249 {offsets = [0, 0], sizes = [2, 32], strides = [1, 1]} : vector<2x128xf32> to vector<2x32xf32>
    %251 = vector.extract_strided_slice %249 {offsets = [0, 32], sizes = [2, 32], strides = [1, 1]} : vector<2x128xf32> to vector<2x32xf32>
    %252 = vector.extract_strided_slice %249 {offsets = [0, 64], sizes = [2, 32], strides = [1, 1]} : vector<2x128xf32> to vector<2x32xf32>
    %253 = vector.extract_strided_slice %249 {offsets = [0, 96], sizes = [2, 32], strides = [1, 1]} : vector<2x128xf32> to vector<2x32xf32>
    %254 = arith.mulf %251, %216 : vector<2x32xf32>
    %255 = arith.mulf %250, %252 : vector<2x32xf32>
    %256 = arith.addf %254, %255 : vector<2x32xf32>
    %257 = math.tanh %256 : vector<2x32xf32>
    %258 = arith.mulf %253, %257 : vector<2x32xf32>
    %259 = vector.extract_strided_slice %7 {offsets = [0, 6, 0], sizes = [2, 1, 128], strides = [1, 1, 1]} : vector<2x8x128xf32> to vector<2x1x128xf32>
    %260 = vector.shape_cast %259 : vector<2x1x128xf32> to vector<2x128xf32>
    %cst_39 = arith.constant dense<0.000000e+00> : vector<2x128xf32>
    %261 = tpu.matmul %238, %8, %cst_39 {dimension_numbers = #tpu.dot_dimension_numbers<[1], [0], [0], [1], [0, 0, 1, 1], [], []>} : vector<2x32xf32>, vector<32x128xf32>, vector<2x128xf32> -> vector<2x128xf32>
    %262 = arith.addf %260, %261 : vector<2x128xf32>
    %263 = math.tanh %262 : vector<2x128xf32>
    %264 = arith.negf %262 : vector<2x128xf32>
    %265 = math.exp %264 : vector<2x128xf32>
    %cst_40 = arith.constant 1.000000e+00 : f32
    %266 = vector.broadcast %cst_40 : f32 to vector<2x128xf32>
    %267 = arith.addf %266, %265 : vector<2x128xf32>
    %268 = arith.divf %266, %267 : vector<2x128xf32>
    %269 = arith.select %17, %263, %268 : vector<2x128xi1>, vector<2x128xf32>
    %270 = vector.extract_strided_slice %269 {offsets = [0, 0], sizes = [2, 32], strides = [1, 1]} : vector<2x128xf32> to vector<2x32xf32>
    %271 = vector.extract_strided_slice %269 {offsets = [0, 32], sizes = [2, 32], strides = [1, 1]} : vector<2x128xf32> to vector<2x32xf32>
    %272 = vector.extract_strided_slice %269 {offsets = [0, 64], sizes = [2, 32], strides = [1, 1]} : vector<2x128xf32> to vector<2x32xf32>
    %273 = vector.extract_strided_slice %269 {offsets = [0, 96], sizes = [2, 32], strides = [1, 1]} : vector<2x128xf32> to vector<2x32xf32>
    %274 = arith.mulf %271, %236 : vector<2x32xf32>
    %275 = arith.mulf %270, %272 : vector<2x32xf32>
    %276 = arith.addf %274, %275 : vector<2x32xf32>
    %277 = math.tanh %276 : vector<2x32xf32>
    %278 = arith.mulf %273, %277 : vector<2x32xf32>
    %279 = tpu.concatenate %278, %258 in 1 : vector<2x32xf32>, vector<2x32xf32> -> vector<2x64xf32>
    %cst_41 = arith.constant dense<0.000000e+00> : vector<2x128xf32>
    %280 = tpu.matmul %279, %9, %cst_41 {dimension_numbers = #tpu.dot_dimension_numbers<[1], [0], [0], [1], [0, 0, 1, 1], [], []>} : vector<2x64xf32>, vector<64x128xf32>, vector<2x128xf32> -> vector<2x128xf32>
    %281 = vector.broadcast %10 : vector<1x128xf32> to vector<2x128xf32>
    %282 = arith.addf %280, %281 : vector<2x128xf32>
    %283 = math.tanh %282 : vector<2x128xf32>
    %284 = arith.negf %282 : vector<2x128xf32>
    %285 = math.exp %284 : vector<2x128xf32>
    %cst_42 = arith.constant 1.000000e+00 : f32
    %286 = vector.broadcast %cst_42 : f32 to vector<2x128xf32>
    %287 = arith.addf %286, %285 : vector<2x128xf32>
    %288 = arith.divf %286, %287 : vector<2x128xf32>
    %289 = arith.select %17, %283, %288 : vector<2x128xi1>, vector<2x128xf32>
    %290 = vector.extract_strided_slice %289 {offsets = [0, 0], sizes = [2, 32], strides = [1, 1]} : vector<2x128xf32> to vector<2x32xf32>
    %291 = vector.extract_strided_slice %289 {offsets = [0, 32], sizes = [2, 32], strides = [1, 1]} : vector<2x128xf32> to vector<2x32xf32>
    %292 = vector.extract_strided_slice %289 {offsets = [0, 64], sizes = [2, 32], strides = [1, 1]} : vector<2x128xf32> to vector<2x32xf32>
    %293 = vector.extract_strided_slice %289 {offsets = [0, 96], sizes = [2, 32], strides = [1, 1]} : vector<2x128xf32> to vector<2x32xf32>
    %294 = arith.mulf %291, %256 : vector<2x32xf32>
    %295 = arith.mulf %290, %292 : vector<2x32xf32>
    %296 = arith.addf %294, %295 : vector<2x32xf32>
    %297 = math.tanh %296 : vector<2x32xf32>
    %298 = arith.mulf %293, %297 : vector<2x32xf32>
    %299 = vector.extract_strided_slice %7 {offsets = [0, 7, 0], sizes = [2, 1, 128], strides = [1, 1, 1]} : vector<2x8x128xf32> to vector<2x1x128xf32>
    %300 = vector.shape_cast %299 : vector<2x1x128xf32> to vector<2x128xf32>
    %cst_43 = arith.constant dense<0.000000e+00> : vector<2x128xf32>
    %301 = tpu.matmul %278, %8, %cst_43 {dimension_numbers = #tpu.dot_dimension_numbers<[1], [0], [0], [1], [0, 0, 1, 1], [], []>} : vector<2x32xf32>, vector<32x128xf32>, vector<2x128xf32> -> vector<2x128xf32>
    %302 = arith.addf %300, %301 : vector<2x128xf32>
    %303 = math.tanh %302 : vector<2x128xf32>
    %304 = arith.negf %302 : vector<2x128xf32>
    %305 = math.exp %304 : vector<2x128xf32>
    %cst_44 = arith.constant 1.000000e+00 : f32
    %306 = vector.broadcast %cst_44 : f32 to vector<2x128xf32>
    %307 = arith.addf %306, %305 : vector<2x128xf32>
    %308 = arith.divf %306, %307 : vector<2x128xf32>
    %309 = arith.select %17, %303, %308 : vector<2x128xi1>, vector<2x128xf32>
    %310 = vector.extract_strided_slice %309 {offsets = [0, 0], sizes = [2, 32], strides = [1, 1]} : vector<2x128xf32> to vector<2x32xf32>
    %311 = vector.extract_strided_slice %309 {offsets = [0, 32], sizes = [2, 32], strides = [1, 1]} : vector<2x128xf32> to vector<2x32xf32>
    %312 = vector.extract_strided_slice %309 {offsets = [0, 64], sizes = [2, 32], strides = [1, 1]} : vector<2x128xf32> to vector<2x32xf32>
    %313 = vector.extract_strided_slice %309 {offsets = [0, 96], sizes = [2, 32], strides = [1, 1]} : vector<2x128xf32> to vector<2x32xf32>
    %314 = arith.mulf %311, %276 : vector<2x32xf32>
    %315 = arith.mulf %310, %312 : vector<2x32xf32>
    %316 = arith.addf %314, %315 : vector<2x32xf32>
    %317 = math.tanh %316 : vector<2x32xf32>
    %318 = arith.mulf %313, %317 : vector<2x32xf32>
    %319 = tpu.concatenate %318, %298 in 1 : vector<2x32xf32>, vector<2x32xf32> -> vector<2x64xf32>
    %cst_45 = arith.constant dense<0.000000e+00> : vector<2x128xf32>
    %320 = tpu.matmul %319, %9, %cst_45 {dimension_numbers = #tpu.dot_dimension_numbers<[1], [0], [0], [1], [0, 0, 1, 1], [], []>} : vector<2x64xf32>, vector<64x128xf32>, vector<2x128xf32> -> vector<2x128xf32>
    %321 = vector.broadcast %10 : vector<1x128xf32> to vector<2x128xf32>
    %322 = arith.addf %320, %321 : vector<2x128xf32>
    %323 = math.tanh %322 : vector<2x128xf32>
    %324 = arith.negf %322 : vector<2x128xf32>
    %325 = math.exp %324 : vector<2x128xf32>
    %cst_46 = arith.constant 1.000000e+00 : f32
    %326 = vector.broadcast %cst_46 : f32 to vector<2x128xf32>
    %327 = arith.addf %326, %325 : vector<2x128xf32>
    %328 = arith.divf %326, %327 : vector<2x128xf32>
    %329 = arith.select %17, %323, %328 : vector<2x128xi1>, vector<2x128xf32>
    %330 = vector.extract_strided_slice %329 {offsets = [0, 0], sizes = [2, 32], strides = [1, 1]} : vector<2x128xf32> to vector<2x32xf32>
    %331 = vector.extract_strided_slice %329 {offsets = [0, 32], sizes = [2, 32], strides = [1, 1]} : vector<2x128xf32> to vector<2x32xf32>
    %332 = vector.extract_strided_slice %329 {offsets = [0, 64], sizes = [2, 32], strides = [1, 1]} : vector<2x128xf32> to vector<2x32xf32>
    %333 = vector.extract_strided_slice %329 {offsets = [0, 96], sizes = [2, 32], strides = [1, 1]} : vector<2x128xf32> to vector<2x32xf32>
    %334 = arith.mulf %331, %296 : vector<2x32xf32>
    %335 = arith.mulf %330, %332 : vector<2x32xf32>
    %336 = arith.addf %334, %335 : vector<2x32xf32>
    %337 = math.tanh %336 : vector<2x32xf32>
    %338 = arith.mulf %333, %337 : vector<2x32xf32>
    %339 = vector.shape_cast %58 : vector<2x32xf32> to vector<2x1x32xf32>
    %340 = vector.shape_cast %98 : vector<2x32xf32> to vector<2x1x32xf32>
    %341 = vector.shape_cast %138 : vector<2x32xf32> to vector<2x1x32xf32>
    %342 = vector.shape_cast %178 : vector<2x32xf32> to vector<2x1x32xf32>
    %343 = vector.shape_cast %218 : vector<2x32xf32> to vector<2x1x32xf32>
    %344 = vector.shape_cast %258 : vector<2x32xf32> to vector<2x1x32xf32>
    %345 = vector.shape_cast %298 : vector<2x32xf32> to vector<2x1x32xf32>
    %346 = vector.shape_cast %338 : vector<2x32xf32> to vector<2x1x32xf32>
    %347 = tpu.concatenate %339, %340, %341, %342, %343, %344, %345, %346 in 1 : vector<2x1x32xf32>, vector<2x1x32xf32>, vector<2x1x32xf32>, vector<2x1x32xf32>, vector<2x1x32xf32>, vector<2x1x32xf32>, vector<2x1x32xf32>, vector<2x1x32xf32> -> vector<2x8x32xf32>
    %348 = vector.shape_cast %347 : vector<2x8x32xf32> to vector<16x32xf32>
    %cst_47 = arith.constant dense<0.000000e+00> : vector<16x3xf32>
    %349 = tpu.matmul %348, %11, %cst_47 {dimension_numbers = #tpu.dot_dimension_numbers<[1], [0], [0], [1], [0, 0, 1, 1], [], []>} : vector<16x32xf32>, vector<32x3xf32>, vector<16x3xf32> -> vector<16x3xf32>
    %350 = vector.shape_cast %349 : vector<16x3xf32> to vector<2x8x3xf32>
    %c0_48 = arith.constant 0 : index
    %c0_49 = arith.constant 0 : index
    %c0_50 = arith.constant 0 : index
    %351 = vector.load %arg7[%c0_48, %c0_49, %c0_50] : memref<2x8x3xf32, #tpu.memory_space<vmem>>, vector<2x8x3xf32>
    tpu.vector_store %arg7[%c0_48, %c0_49, %c0_50], %350 {strides = array<i32>} : memref<2x8x3xf32, #tpu.memory_space<vmem>>, vector<2x8x3xf32>,
    return
  }
}

</mosaic_0001>

<llo_original>
// kernel: custom_lstm_forward.1
$region0: #{custom_lstm_forward.1}
  #allocation0 [shape = 'u32[]', space=smem, size = 0x4, offset = 0x4, fixed_abs, tag = 'smem constant byte address 0x4 - core index']
  #allocation1 [shape = 'u32[72,128]{1,0:T(1,128)}', space=vmem, size = 0x9000, scoped, tag = 'internal scratch']
  %s0 = inlined_call_operand.vmem [shape: f32[2,8,4], index: 0, kind: input, shape index: {}]
  %s1 = inlined_call_operand.vmem [shape: f32[4,128], index: 1, kind: input, shape index: {}]
  %s2 = inlined_call_operand.vmem [shape: f32[32,128], index: 2, kind: input, shape index: {}]
  %s3 = inlined_call_operand.vmem [shape: f32[1,128], index: 3, kind: input, shape index: {}]
  %s4 = inlined_call_operand.vmem [shape: f32[64,128], index: 4, kind: input, shape index: {}]
  %s5 = inlined_call_operand.vmem [shape: f32[1,128], index: 5, kind: input, shape index: {}]
  %s6 = inlined_call_operand.vmem [shape: f32[32,3], index: 6, kind: input, shape index: {}]
  %s7 = inlined_call_operand.vmem [shape: f32[2,8,3], index: 7, kind: output, shape index: {}]
  %s8 = sld [smem:[#allocation0]]
  $region38: #{custom_lstm_forward.1} parent=0
    _
  %s10 = ssub.s32 1, %s8
  %s11 = scalar_select 0, %s10, %s8
  // Predicated region
  $region2: #{custom_lstm_forward.1} parent=0 // pred_check
    _
  $region3: #{custom_lstm_forward.1} parent=0 // pred_check_branch
    %13 = sbr.rel (0) target = $region5
  $region4: #{custom_lstm_forward.1} parent=0 // pred_region
    _
  $region5: #{custom_lstm_forward.1} parent=0 // pred_fallthru
    _
  // Predicated region
  $region6: #{custom_lstm_forward.1} parent=0 // pred_check
    _
  $region7: #{custom_lstm_forward.1} parent=0 // pred_check_branch
    %15 = sbr.rel (0) target = $region9
  $region8: #{custom_lstm_forward.1} parent=0 // pred_region
    _
  $region9: #{custom_lstm_forward.1} parent=0 // pred_fallthru
    _
  // Predicated region
  $region10: #{custom_lstm_forward.1} parent=0 // pred_check
    _
  $region11: #{custom_lstm_forward.1} parent=0 // pred_check_branch
    %17 = sbr.rel (0) target = $region13
  $region12: #{custom_lstm_forward.1} parent=0 // pred_region
    _
  $region13: #{custom_lstm_forward.1} parent=0 // pred_fallthru
    _
  // Predicated region
  $region14: #{custom_lstm_forward.1} parent=0 // pred_check
    _
  $region15: #{custom_lstm_forward.1} parent=0 // pred_check_branch
    %19 = sbr.rel (0) target = $region17
  $region16: #{custom_lstm_forward.1} parent=0 // pred_region
    _
  $region17: #{custom_lstm_forward.1} parent=0 // pred_fallthru
    _
  // Predicated region
  $region18: #{custom_lstm_forward.1} parent=0 // pred_check
    _
  $region19: #{custom_lstm_forward.1} parent=0 // pred_check_branch
    %21 = sbr.rel (0) target = $region21
  $region20: #{custom_lstm_forward.1} parent=0 // pred_region
    _
  $region21: #{custom_lstm_forward.1} parent=0 // pred_fallthru
    _
  // Predicated region
  $region22: #{custom_lstm_forward.1} parent=0 // pred_check
    _
  $region23: #{custom_lstm_forward.1} parent=0 // pred_check_branch
    %23 = sbr.rel (0) target = $region25
  $region24: #{custom_lstm_forward.1} parent=0 // pred_region
    _
  $region25: #{custom_lstm_forward.1} parent=0 // pred_fallthru
    _
  // Predicated region
  $region26: #{custom_lstm_forward.1} parent=0 // pred_check
    _
  $region27: #{custom_lstm_forward.1} parent=0 // pred_check_branch
    %25 = sbr.rel (0) target = $region29
  $region28: #{custom_lstm_forward.1} parent=0 // pred_region
    _
  $region29: #{custom_lstm_forward.1} parent=0 // pred_fallthru
    _
  %v26 = vld [vmem:[%s0] sm:$0xff]
  %v27 = vld [vmem:[%s0 + $0x8] sm:$0xff]
  %v28 = vld [vmem:[%s1] sm:$0xf]
  %v29 = vld [vmem:[%s3] sm:$0x1]
  %v31 = vperm.slane %v29, 0
  %vm33 = vcmask 31744
  %v35 = vsel %vm33, %v26, 0
  %v38 = vsel %vm33, %v27, 0
  %vm40 = vcmask 1043456
  %v42 = vsel %vm40, %v28, 0
  %44 = vmatpush.msra.mxu0 0.0
  %45 = vmatpush.msra.mxu0 0.0
  %46 = vmatpush.msra.mxu0 0.0
  %47 = vmatpush.msra.mxu0 0.0
  %48 = vmatpush.msra.mxu0 0.0
  %49 = vmatpush.msra.mxu0 0.0
  %50 = vmatpush.msra.mxu0 0.0
  %51 = vmatpush.msra.mxu0 0.0
  %52 = vmatpush.msra.mxu0 0.0
  %53 = vmatpush.msra.mxu0 0.0
  %54 = vmatpush.msra.mxu0 0.0
  %55 = vmatpush.msra.mxu0 0.0
  %56 = vmatpush.msra.mxu0 0.0
  %57 = vmatpush.msra.mxu0 0.0
  %58 = vmatpush.msra.mxu0 0.0
  %59 = vmatpush.msra.mxu0 %v42
  %60 = vmatmul.f32.gmra.mxu0 %v35
  %v61 = vpop.f32.mrf.mxu0
  %v62 = vadd.f32 %v31, %v61
  %63 = vmatmul.f32.gmra.mxu0 %v38
  %v64 = vpop.f32.mrf.mxu0
  %v65 = vadd.f32 %v31, %v64
  %66 = vdwg.mxu0
  %v67 = vld [vmem:[%s2] sm:$0xff]
  %v68 = vld [vmem:[%s2 + $0x8] sm:$0xff]
  %v69 = vld [vmem:[%s2 + $0x10] sm:$0xff]
  %v70 = vld [vmem:[%s2 + $0x18] sm:$0xff]
  %v71 = vld [vmem:[%s4] sm:$0xff]
  %v72 = vld [vmem:[%s4 + $0x8] sm:$0xff]
  %v73 = vld [vmem:[%s4 + $0x10] sm:$0xff]
  %v74 = vld [vmem:[%s4 + $0x18] sm:$0xff]
  %v75 = vld [vmem:[%s4 + $0x20] sm:$0xff]
  %v76 = vld [vmem:[%s4 + $0x28] sm:$0xff]
  %v77 = vld [vmem:[%s4 + $0x30] sm:$0xff]
  %v78 = vld [vmem:[%s4 + $0x38] sm:$0xff]
  %v79 = vld [vmem:[%s5] sm:$0x1]
  %v80 = vld [vmem:[%s6] sm:$0xff]
  %v81 = vld [vmem:[%s6 + $0x8] sm:$0xff]
  %v82 = vld [vmem:[%s6 + $0x10] sm:$0xff]
  %v83 = vld [vmem:[%s6 + $0x18] sm:$0xff]
  %v84 = vlaneseq
  %v85 = vand.u32 %v84, 127
  %vm86 = vcmp.ge.s32.totalorder %v85, 64
  %vm87 = vcmp.lt.s32.totalorder %v85, 96
  %vm88 = vmand %vm86, %vm87
  %vm89 = vcmask 261120
  %v91 = vsel %vm89, 0.0, 0
  %93 = vmatpush.msra.mxu0 0.0
  %94 = vmatpush.msra.mxu0 0.0
  %95 = vmatpush.msra.mxu0 0.0
  %96 = vmatpush.msra.mxu0 0.0
  %97 = vmatpush.msra.mxu0 0.0
  %98 = vmatpush.msra.mxu0 0.0
  %99 = vmatpush.msra.mxu0 0.0
  %100 = vmatpush.msra.mxu0 0.0
  %101 = vmatpush.msra.mxu0 0.0
  %102 = vmatpush.msra.mxu0 0.0
  %103 = vmatpush.msra.mxu0 0.0
  %104 = vmatpush.msra.mxu0 0.0
  %105 = vmatpush.msra.mxu0 %v70
  %106 = vmatpush.msra.mxu0 %v69
  %107 = vmatpush.msra.mxu0 %v68
  %108 = vmatpush.msra.mxu0 %v67
  %109 = vmatmul.f32.gmra.mxu0 %v91
  %v110 = vpop.f32.mrf.mxu0
  %v111 = vadd.f32 0.0, %v110
  %112 = vdwg.mxu0
  %v114 = vrot.slane %v111, 1
  %v117 = vadd.f32 %v62, %v111
  %v118 = vadd.f32 %v65, %v114
  %v119 = vtanh.pop %v117
  %v120 = vtanh.pop %v118
  %v121 = vxor.u32 %v117, 2147483648
  %v122 = vxor.u32 %v118, 2147483648
  %v123 = vmul.f32 %v121, 1.442695
  %v124 = vpow.pop %v123
  %v125 = vmul.f32 %v122, 1.442695
  %v126 = vpow.pop %v125
  %v127 = vadd.f32 %v124, 1.0
  %v128 = vadd.f32 %v126, 1.0
  %v129 = vrcp.pop %v127
  %v130 = vmul.f32 %v127, %v129
  %v131 = vsub.f32 1.0, %v130
  %v132 = vmul.f32 %v129, %v131
  %v133 = vadd.f32 %v129, %v132
  %vm134 = vweird.f32 %v127
  %vm135 = vweird.f32 %v129
  %vm136 = vmor %vm134, %vm135
  %v137 = vsel %vm136, %v129, %v133
  %v138 = vand.u32 2147483647, %v127
  %vm139 = vcmp.eq.f32.partialorder %v138, 8.507059e+37
  %v140 = vand.u32 %v127, 2147483648
  %v141 = vor.u32 1.1754944e-38, %v140
  %v142 = vsel %vm139, %v141, %v137
  %v143 = vmul.f32 1.0, %v142
  %v144 = vrcp.pop %v128
  %v145 = vmul.f32 %v128, %v144
  %v146 = vsub.f32 1.0, %v145
  %v147 = vmul.f32 %v144, %v146
  %v148 = vadd.f32 %v144, %v147
  %vm149 = vweird.f32 %v128
  %vm150 = vweird.f32 %v144
  %vm151 = vmor %vm149, %vm150
  %v152 = vsel %vm151, %v144, %v148
  %v153 = vand.u32 2147483647, %v128
  %vm154 = vcmp.eq.f32.partialorder %v153, 8.507059e+37
  %v155 = vand.u32 %v128, 2147483648
  %v156 = vor.u32 1.1754944e-38, %v155
  %v157 = vsel %vm154, %v156, %v152
  %v158 = vmul.f32 1.0, %v157
  %v161 = vrot.slane %v120, 7
  %vm162 = vcmask 1041409
  %v163 = vsel %vm162, %v161, %v119
  %v167 = vrot.slane %v158, 7
  %v168 = vsel %vm162, %v167, %v143
  %v170 = vsel %vm88, %v163, %v168
  %v171 = vmul.f32 %v170, 0.0
  %173 = vrot.lane.b32.xlu0 %v170, 64
  %v174 = vpop.permute.xlu0 %173
  %v176 = vmul.f32 %v170, %v174
  %178 = vrot.lane.b32.xlu0 %v176, 32
  %v179 = vpop.permute.xlu0 %178
  %v181 = vadd.f32 %v171, %v179
  %v182 = vtanh.pop %v181
  %184 = vrot.lane.b32.xlu0 %v182, 64
  %v185 = vpop.permute.xlu0 %184
  %v187 = vmul.f32 %v170, %v185
  %189 = vrot.lane.b32.xlu0 %v187, 32
  %v190 = vpop.permute.xlu0 %189
  %v192 = vsel %vm89, %v190, 0.0
  %v194 = vperm.slane %v79, 0
  %vm196 = vcmask 523264
  %v198 = vsel %vm196, %v192, 0
  %200 = vmatpush.msra.mxu0 0.0
  %201 = vmatpush.msra.mxu0 0.0
  %202 = vmatpush.msra.mxu0 0.0
  %203 = vmatpush.msra.mxu0 0.0
  %204 = vmatpush.msra.mxu0 0.0
  %205 = vmatpush.msra.mxu0 0.0
  %206 = vmatpush.msra.mxu0 0.0
  %207 = vmatpush.msra.mxu0 0.0
  %208 = vmatpush.msra.mxu0 %v78
  %209 = vmatpush.msra.mxu0 %v77
  %210 = vmatpush.msra.mxu0 %v76
  %211 = vmatpush.msra.mxu0 %v75
  %212 = vmatpush.msra.mxu0 %v74
  %213 = vmatpush.msra.mxu0 %v73
  %214 = vmatpush.msra.mxu0 %v72
  %215 = vmatpush.msra.mxu0 %v71
  %216 = vmatmul.f32.gmra.mxu0 %v198
  %v217 = vpop.f32.mrf.mxu0
  %v218 = vadd.f32 %v194, %v217
  %219 = vdwg.mxu0
  %v220 = vtanh.pop %v218
  %v221 = vxor.u32 %v218, 2147483648
  %v222 = vmul.f32 %v221, 1.442695
  %v223 = vpow.pop %v222
  %v224 = vadd.f32 %v223, 1.0
  %v225 = vrcp.pop %v224
  %v226 = vmul.f32 %v224, %v225
  %v227 = vsub.f32 1.0, %v226
  %v228 = vmul.f32 %v225, %v227
  %v229 = vadd.f32 %v225, %v228
  %vm230 = vweird.f32 %v224
  %vm231 = vweird.f32 %v225
  %vm232 = vmor %vm230, %vm231
  %v233 = vsel %vm232, %v225, %v229
  %v234 = vand.u32 2147483647, %v224
  %vm235 = vcmp.eq.f32.partialorder %v234, 8.507059e+37
  %v236 = vand.u32 %v224, 2147483648
  %v237 = vor.u32 1.1754944e-38, %v236
  %v238 = vsel %vm235, %v237, %v233
  %v239 = vmul.f32 1.0, %v238
  %v240 = vsel %vm88, %v220, %v239
  %v241 = vmul.f32 %v240, 0.0
  %243 = vrot.lane.b32.xlu0 %v240, 64
  %v244 = vpop.permute.xlu0 %243
  %v246 = vmul.f32 %v240, %v244
  %248 = vrot.lane.b32.xlu0 %v246, 32
  %v249 = vpop.permute.xlu0 %248
  %v251 = vadd.f32 %v241, %v249
  %v252 = vtanh.pop %v251
  %254 = vrot.lane.b32.xlu0 %v252, 64
  %v255 = vpop.permute.xlu0 %254
  %v257 = vmul.f32 %v240, %v255
  %v258 = vsel %vm89, %v190, 0
  %260 = vmatpush.msra.mxu0 0.0
  %261 = vmatpush.msra.mxu0 0.0
  %262 = vmatpush.msra.mxu0 0.0
  %263 = vmatpush.msra.mxu0 0.0
  %264 = vmatpush.msra.mxu0 0.0
  %265 = vmatpush.msra.mxu0 0.0
  %266 = vmatpush.msra.mxu0 0.0
  %267 = vmatpush.msra.mxu0 0.0
  %268 = vmatpush.msra.mxu0 0.0
  %269 = vmatpush.msra.mxu0 0.0
  %270 = vmatpush.msra.mxu0 0.0
  %271 = vmatpush.msra.mxu0 0.0
  %272 = vmatpush.msra.mxu0 %v70
  %273 = vmatpush.msra.mxu0 %v69
  %274 = vmatpush.msra.mxu0 %v68
  %275 = vmatpush.msra.mxu0 %v67
  %276 = vmatmul.f32.gmra.mxu0 %v258
  %v277 = vpop.f32.mrf.mxu0
  %v278 = vadd.f32 0.0, %v277
  %279 = vdwg.mxu0
  %v281 = vrot.slane %v278, 7
  %v284 = vadd.f32 %v62, %v281
  %v285 = vadd.f32 %v65, %v278
  %v286 = vtanh.pop %v284
  %v287 = vtanh.pop %v285
  %v288 = vxor.u32 %v284, 2147483648
  %v289 = vxor.u32 %v285, 2147483648
  %v290 = vmul.f32 %v288, 1.442695
  %v291 = vpow.pop %v290
  %v292 = vmul.f32 %v289, 1.442695
  %v293 = vpow.pop %v292
  %v294 = vadd.f32 %v291, 1.0
  %v295 = vadd.f32 %v293, 1.0
  %v296 = vrcp.pop %v294
  %v297 = vmul.f32 %v294, %v296
  %v298 = vsub.f32 1.0, %v297
  %v299 = vmul.f32 %v296, %v298
  %v300 = vadd.f32 %v296, %v299
  %vm301 = vweird.f32 %v294
  %vm302 = vweird.f32 %v296
  %vm303 = vmor %vm301, %vm302
  %v304 = vsel %vm303, %v296, %v300
  %v305 = vand.u32 2147483647, %v294
  %vm306 = vcmp.eq.f32.partialorder %v305, 8.507059e+37
  %v307 = vand.u32 %v294, 2147483648
  %v308 = vor.u32 1.1754944e-38, %v307
  %v309 = vsel %vm306, %v308, %v304
  %v310 = vmul.f32 1.0, %v309
  %v311 = vrcp.pop %v295
  %v312 = vmul.f32 %v295, %v311
  %v313 = vsub.f32 1.0, %v312
  %v314 = vmul.f32 %v311, %v313
  %v315 = vadd.f32 %v311, %v314
  %vm316 = vweird.f32 %v295
  %vm317 = vweird.f32 %v311
  %vm318 = vmor %vm316, %vm317
  %v319 = vsel %vm318, %v311, %v315
  %v320 = vand.u32 2147483647, %v295
  %vm321 = vcmp.eq.f32.partialorder %v320, 8.507059e+37
  %v322 = vand.u32 %v295, 2147483648
  %v323 = vor.u32 1.1754944e-38, %v322
  %v324 = vsel %vm321, %v323, %v319
  %v325 = vmul.f32 1.0, %v324
  %v328 = vrot.slane %v286, 1
  %v329 = vsel %vm162, %v287, %v328
  %v333 = vrot.slane %v310, 1
  %v334 = vsel %vm162, %v325, %v333
  %v336 = vsel %vm88, %v329, %v334
  %v337 = vmul.f32 %v336, %v181
  %339 = vrot.lane.b32.xlu0 %v336, 64
  %v340 = vpop.permute.xlu0 %339
  %v342 = vmul.f32 %v336, %v340
  %344 = vrot.lane.b32.xlu0 %v342, 32
  %v345 = vpop.permute.xlu0 %344
  %v347 = vadd.f32 %v337, %v345
  %v348 = vtanh.pop %v347
  %350 = vrot.lane.b32.xlu0 %v348, 64
  %v351 = vpop.permute.xlu0 %350
  %v353 = vmul.f32 %v336, %v351
  %355 = vrot.lane.b32.xlu0 %v353, 32
  %v356 = vpop.permute.xlu0 %355
  %359 = vrot.lane.b32.xlu0 %v257, 64
  %v360 = vpop.permute.xlu0 %359
  %v362 = vsel %vm89, %v356, %v360
  %v364 = vsel %vm196, %v362, 0
  %366 = vmatpush.msra.mxu0 0.0
  %367 = vmatpush.msra.mxu0 0.0
  %368 = vmatpush.msra.mxu0 0.0
  %369 = vmatpush.msra.mxu0 0.0
  %370 = vmatpush.msra.mxu0 0.0
  %371 = vmatpush.msra.mxu0 0.0
  %372 = vmatpush.msra.mxu0 0.0
  %373 = vmatpush.msra.mxu0 0.0
  %374 = vmatpush.msra.mxu0 %v78
  %375 = vmatpush.msra.mxu0 %v77
  %376 = vmatpush.msra.mxu0 %v76
  %377 = vmatpush.msra.mxu0 %v75
  %378 = vmatpush.msra.mxu0 %v74
  %379 = vmatpush.msra.mxu0 %v73
  %380 = vmatpush.msra.mxu0 %v72
  %381 = vmatpush.msra.mxu0 %v71
  %382 = vmatmul.f32.gmra.mxu0 %v364
  %v383 = vpop.f32.mrf.mxu0
  %v384 = vadd.f32 %v194, %v383
  %385 = vdwg.mxu0
  %v386 = vtanh.pop %v384
  %v387 = vxor.u32 %v384, 2147483648
  %v388 = vmul.f32 %v387, 1.442695
  %v389 = vpow.pop %v388
  %v390 = vadd.f32 %v389, 1.0
  %v391 = vrcp.pop %v390
  %v392 = vmul.f32 %v390, %v391
  %v393 = vsub.f32 1.0, %v392
  %v394 = vmul.f32 %v391, %v393
  %v395 = vadd.f32 %v391, %v394
  %vm396 = vweird.f32 %v390
  %vm397 = vweird.f32 %v391
  %vm398 = vmor %vm396, %vm397
  %v399 = vsel %vm398, %v391, %v395
  %v400 = vand.u32 2147483647, %v390
  %vm401 = vcmp.eq.f32.partialorder %v400, 8.507059e+37
  %v402 = vand.u32 %v390, 2147483648
  %v403 = vor.u32 1.1754944e-38, %v402
  %v404 = vsel %vm401, %v403, %v399
  %v405 = vmul.f32 1.0, %v404
  %v406 = vsel %vm88, %v386, %v405
  %v407 = vmul.f32 %v406, %v251
  %409 = vrot.lane.b32.xlu0 %v406, 64
  %v410 = vpop.permute.xlu0 %409
  %v412 = vmul.f32 %v406, %v410
  %414 = vrot.lane.b32.xlu0 %v412, 32
  %v415 = vpop.permute.xlu0 %414
  %v417 = vadd.f32 %v407, %v415
  %v418 = vtanh.pop %v417
  %420 = vrot.lane.b32.xlu0 %v418, 64
  %v421 = vpop.permute.xlu0 %420
  %v423 = vmul.f32 %v406, %v421
  %v424 = vsel %vm89, %v356, 0
  %426 = vmatpush.msra.mxu0 0.0
  %427 = vmatpush.msra.mxu0 0.0
  %428 = vmatpush.msra.mxu0 0.0
  %429 = vmatpush.msra.mxu0 0.0
  %430 = vmatpush.msra.mxu0 0.0
  %431 = vmatpush.msra.mxu0 0.0
  %432 = vmatpush.msra.mxu0 0.0
  %433 = vmatpush.msra.mxu0 0.0
  %434 = vmatpush.msra.mxu0 0.0
  %435 = vmatpush.msra.mxu0 0.0
  %436 = vmatpush.msra.mxu0 0.0
  %437 = vmatpush.msra.mxu0 0.0
  %438 = vmatpush.msra.mxu0 %v70
  %439 = vmatpush.msra.mxu0 %v69
  %440 = vmatpush.msra.mxu0 %v68
  %441 = vmatpush.msra.mxu0 %v67
  %442 = vmatmul.f32.gmra.mxu0 %v424
  %v443 = vpop.f32.mrf.mxu0
  %v444 = vadd.f32 0.0, %v443
  %445 = vdwg.mxu0
  %v447 = vrot.slane %v444, 6
  %v448 = vrot.slane %v444, 7
  %v451 = vadd.f32 %v62, %v447
  %v452 = vadd.f32 %v65, %v448
  %v453 = vtanh.pop %v451
  %v454 = vtanh.pop %v452
  %v455 = vxor.u32 %v451, 2147483648
  %v456 = vxor.u32 %v452, 2147483648
  %v457 = vmul.f32 %v455, 1.442695
  %v458 = vpow.pop %v457
  %v459 = vmul.f32 %v456, 1.442695
  %v460 = vpow.pop %v459
  %v461 = vadd.f32 %v458, 1.0
  %v462 = vadd.f32 %v460, 1.0
  %v463 = vrcp.pop %v461
  %v464 = vmul.f32 %v461, %v463
  %v465 = vsub.f32 1.0, %v464
  %v466 = vmul.f32 %v463, %v465
  %v467 = vadd.f32 %v463, %v466
  %vm468 = vweird.f32 %v461
  %vm469 = vweird.f32 %v463
  %vm470 = vmor %vm468, %vm469
  %v471 = vsel %vm470, %v463, %v467
  %v472 = vand.u32 2147483647, %v461
  %vm473 = vcmp.eq.f32.partialorder %v472, 8.507059e+37
  %v474 = vand.u32 %v461, 2147483648
  %v475 = vor.u32 1.1754944e-38, %v474
  %v476 = vsel %vm473, %v475, %v471
  %v477 = vmul.f32 1.0, %v476
  %v478 = vrcp.pop %v462
  %v479 = vmul.f32 %v462, %v478
  %v480 = vsub.f32 1.0, %v479
  %v481 = vmul.f32 %v478, %v480
  %v482 = vadd.f32 %v478, %v481
  %vm483 = vweird.f32 %v462
  %vm484 = vweird.f32 %v478
  %vm485 = vmor %vm483, %vm484
  %v486 = vsel %vm485, %v478, %v482
  %v487 = vand.u32 2147483647, %v462
  %vm488 = vcmp.eq.f32.partialorder %v487, 8.507059e+37
  %v489 = vand.u32 %v462, 2147483648
  %v490 = vor.u32 1.1754944e-38, %v489
  %v491 = vsel %vm488, %v490, %v486
  %v492 = vmul.f32 1.0, %v491
  %v495 = vrot.slane %v453, 2
  %v496 = vrot.slane %v454, 1
  %v497 = vsel %vm162, %v496, %v495
  %v501 = vrot.slane %v477, 2
  %v502 = vrot.slane %v492, 1
  %v503 = vsel %vm162, %v502, %v501
  %v505 = vsel %vm88, %v497, %v503
  %v506 = vmul.f32 %v505, %v347
  %508 = vrot.lane.b32.xlu0 %v505, 64
  %v509 = vpop.permute.xlu0 %508
  %v511 = vmul.f32 %v505, %v509
  %513 = vrot.lane.b32.xlu0 %v511, 32
  %v514 = vpop.permute.xlu0 %513
  %v516 = vadd.f32 %v506, %v514
  %v517 = vtanh.pop %v516
  %519 = vrot.lane.b32.xlu0 %v517, 64
  %v520 = vpop.permute.xlu0 %519
  %v522 = vmul.f32 %v505, %v520
  %524 = vrot.lane.b32.xlu0 %v522, 32
  %v525 = vpop.permute.xlu0 %524
  %528 = vrot.lane.b32.xlu0 %v423, 64
  %v529 = vpop.permute.xlu0 %528
  %v531 = vsel %vm89, %v525, %v529
  %v533 = vsel %vm196, %v531, 0
  %535 = vmatpush.msra.mxu0 0.0
  %536 = vmatpush.msra.mxu0 0.0
  %537 = vmatpush.msra.mxu0 0.0
  %538 = vmatpush.msra.mxu0 0.0
  %539 = vmatpush.msra.mxu0 0.0
  %540 = vmatpush.msra.mxu0 0.0
  %541 = vmatpush.msra.mxu0 0.0
  %542 = vmatpush.msra.mxu0 0.0
  %543 = vmatpush.msra.mxu0 %v78
  %544 = vmatpush.msra.mxu0 %v77
  %545 = vmatpush.msra.mxu0 %v76
  %546 = vmatpush.msra.mxu0 %v75
  %547 = vmatpush.msra.mxu0 %v74
  %548 = vmatpush.msra.mxu0 %v73
  %549 = vmatpush.msra.mxu0 %v72
  %550 = vmatpush.msra.mxu0 %v71
  %551 = vmatmul.f32.gmra.mxu0 %v533
  %v552 = vpop.f32.mrf.mxu0
  %v553 = vadd.f32 %v194, %v552
  %554 = vdwg.mxu0
  %v555 = vtanh.pop %v553
  %v556 = vxor.u32 %v553, 2147483648
  %v557 = vmul.f32 %v556, 1.442695
  %v558 = vpow.pop %v557
  %v559 = vadd.f32 %v558, 1.0
  %v560 = vrcp.pop %v559
  %v561 = vmul.f32 %v559, %v560
  %v562 = vsub.f32 1.0, %v561
  %v563 = vmul.f32 %v560, %v562
  %v564 = vadd.f32 %v560, %v563
  %vm565 = vweird.f32 %v559
  %vm566 = vweird.f32 %v560
  %vm567 = vmor %vm565, %vm566
  %v568 = vsel %vm567, %v560, %v564
  %v569 = vand.u32 2147483647, %v559
  %vm570 = vcmp.eq.f32.partialorder %v569, 8.507059e+37
  %v571 = vand.u32 %v559, 2147483648
  %v572 = vor.u32 1.1754944e-38, %v571
  %v573 = vsel %vm570, %v572, %v568
  %v574 = vmul.f32 1.0, %v573
  %v575 = vsel %vm88, %v555, %v574
  %v576 = vmul.f32 %v575, %v417
  %578 = vrot.lane.b32.xlu0 %v575, 64
  %v579 = vpop.permute.xlu0 %578
  %v581 = vmul.f32 %v575, %v579
  %583 = vrot.lane.b32.xlu0 %v581, 32
  %v584 = vpop.permute.xlu0 %583
  %v586 = vadd.f32 %v576, %v584
  %v587 = vtanh.pop %v586
  %589 = vrot.lane.b32.xlu0 %v587, 64
  %v590 = vpop.permute.xlu0 %589
  %v592 = vmul.f32 %v575, %v590
  %v593 = vsel %vm89, %v525, 0
  %595 = vmatpush.msra.mxu0 0.0
  %596 = vmatpush.msra.mxu0 0.0
  %597 = vmatpush.msra.mxu0 0.0
  %598 = vmatpush.msra.mxu0 0.0
  %599 = vmatpush.msra.mxu0 0.0
  %600 = vmatpush.msra.mxu0 0.0
  %601 = vmatpush.msra.mxu0 0.0
  %602 = vmatpush.msra.mxu0 0.0
  %603 = vmatpush.msra.mxu0 0.0
  %604 = vmatpush.msra.mxu0 0.0
  %605 = vmatpush.msra.mxu0 0.0
  %606 = vmatpush.msra.mxu0 0.0
  %607 = vmatpush.msra.mxu0 %v70
  %608 = vmatpush.msra.mxu0 %v69
  %609 = vmatpush.msra.mxu0 %v68
  %610 = vmatpush.msra.mxu0 %v67
  %611 = vmatmul.f32.gmra.mxu0 %v593
  %v612 = vpop.f32.mrf.mxu0
  %v613 = vadd.f32 0.0, %v612
  %614 = vdwg.mxu0
  %v616 = vrot.slane %v613, 5
  %v617 = vrot.slane %v613, 6
  %v620 = vadd.f32 %v62, %v616
  %v621 = vadd.f32 %v65, %v617
  %v622 = vtanh.pop %v620
  %v623 = vtanh.pop %v621
  %v624 = vxor.u32 %v620, 2147483648
  %v625 = vxor.u32 %v621, 2147483648
  %v626 = vmul.f32 %v624, 1.442695
  %v627 = vpow.pop %v626
  %v628 = vmul.f32 %v625, 1.442695
  %v629 = vpow.pop %v628
  %v630 = vadd.f32 %v627, 1.0
  %v631 = vadd.f32 %v629, 1.0
  %v632 = vrcp.pop %v630
  %v633 = vmul.f32 %v630, %v632
  %v634 = vsub.f32 1.0, %v633
  %v635 = vmul.f32 %v632, %v634
  %v636 = vadd.f32 %v632, %v635
  %vm637 = vweird.f32 %v630
  %vm638 = vweird.f32 %v632
  %vm639 = vmor %vm637, %vm638
  %v640 = vsel %vm639, %v632, %v636
  %v641 = vand.u32 2147483647, %v630
  %vm642 = vcmp.eq.f32.partialorder %v641, 8.507059e+37
  %v643 = vand.u32 %v630, 2147483648
  %v644 = vor.u32 1.1754944e-38, %v643
  %v645 = vsel %vm642, %v644, %v640
  %v646 = vmul.f32 1.0, %v645
  %v647 = vrcp.pop %v631
  %v648 = vmul.f32 %v631, %v647
  %v649 = vsub.f32 1.0, %v648
  %v650 = vmul.f32 %v647, %v649
  %v651 = vadd.f32 %v647, %v650
  %vm652 = vweird.f32 %v631
  %vm653 = vweird.f32 %v647
  %vm654 = vmor %vm652, %vm653
  %v655 = vsel %vm654, %v647, %v651
  %v656 = vand.u32 2147483647, %v631
  %vm657 = vcmp.eq.f32.partialorder %v656, 8.507059e+37
  %v658 = vand.u32 %v631, 2147483648
  %v659 = vor.u32 1.1754944e-38, %v658
  %v660 = vsel %vm657, %v659, %v655
  %v661 = vmul.f32 1.0, %v660
  %v664 = vrot.slane %v622, 3
  %v665 = vrot.slane %v623, 2
  %v666 = vsel %vm162, %v665, %v664
  %v670 = vrot.slane %v646, 3
  %v671 = vrot.slane %v661, 2
  %v672 = vsel %vm162, %v671, %v670
  %v674 = vsel %vm88, %v666, %v672
  %v675 = vmul.f32 %v674, %v516
  %677 = vrot.lane.b32.xlu0 %v674, 64
  %v678 = vpop.permute.xlu0 %677
  %v680 = vmul.f32 %v674, %v678
  %682 = vrot.lane.b32.xlu0 %v680, 32
  %v683 = vpop.permute.xlu0 %682
  %v685 = vadd.f32 %v675, %v683
  %v686 = vtanh.pop %v685
  %688 = vrot.lane.b32.xlu0 %v686, 64
  %v689 = vpop.permute.xlu0 %688
  %v691 = vmul.f32 %v674, %v689
  %693 = vrot.lane.b32.xlu0 %v691, 32
  %v694 = vpop.permute.xlu0 %693
  %697 = vrot.lane.b32.xlu0 %v592, 64
  %v698 = vpop.permute.xlu0 %697
  %v700 = vsel %vm89, %v694, %v698
  %v702 = vsel %vm196, %v700, 0
  %704 = vmatpush.msra.mxu0 0.0
  %705 = vmatpush.msra.mxu0 0.0
  %706 = vmatpush.msra.mxu0 0.0
  %707 = vmatpush.msra.mxu0 0.0
  %708 = vmatpush.msra.mxu0 0.0
  %709 = vmatpush.msra.mxu0 0.0
  %710 = vmatpush.msra.mxu0 0.0
  %711 = vmatpush.msra.mxu0 0.0
  %712 = vmatpush.msra.mxu0 %v78
  %713 = vmatpush.msra.mxu0 %v77
  %714 = vmatpush.msra.mxu0 %v76
  %715 = vmatpush.msra.mxu0 %v75
  %716 = vmatpush.msra.mxu0 %v74
  %717 = vmatpush.msra.mxu0 %v73
  %718 = vmatpush.msra.mxu0 %v72
  %719 = vmatpush.msra.mxu0 %v71
  %720 = vmatmul.f32.gmra.mxu0 %v702
  %v721 = vpop.f32.mrf.mxu0
  %v722 = vadd.f32 %v194, %v721
  %723 = vdwg.mxu0
  %v724 = vtanh.pop %v722
  %v725 = vxor.u32 %v722, 2147483648
  %v726 = vmul.f32 %v725, 1.442695
  %v727 = vpow.pop %v726
  %v728 = vadd.f32 %v727, 1.0
  %v729 = vrcp.pop %v728
  %v730 = vmul.f32 %v728, %v729
  %v731 = vsub.f32 1.0, %v730
  %v732 = vmul.f32 %v729, %v731
  %v733 = vadd.f32 %v729, %v732
  %vm734 = vweird.f32 %v728
  %vm735 = vweird.f32 %v729
  %vm736 = vmor %vm734, %vm735
  %v737 = vsel %vm736, %v729, %v733
  %v738 = vand.u32 2147483647, %v728
  %vm739 = vcmp.eq.f32.partialorder %v738, 8.507059e+37
  %v740 = vand.u32 %v728, 2147483648
  %v741 = vor.u32 1.1754944e-38, %v740
  %v742 = vsel %vm739, %v741, %v737
  %v743 = vmul.f32 1.0, %v742
  %v744 = vsel %vm88, %v724, %v743
  %v745 = vmul.f32 %v744, %v586
  %747 = vrot.lane.b32.xlu0 %v744, 64
  %v748 = vpop.permute.xlu0 %747
  %v750 = vmul.f32 %v744, %v748
  %752 = vrot.lane.b32.xlu0 %v750, 32
  %v753 = vpop.permute.xlu0 %752
  %v755 = vadd.f32 %v745, %v753
  %v756 = vtanh.pop %v755
  %758 = vrot.lane.b32.xlu0 %v756, 64
  %v759 = vpop.permute.xlu0 %758
  %v761 = vmul.f32 %v744, %v759
  %v762 = vsel %vm89, %v694, 0
  %764 = vmatpush.msra.mxu0 0.0
  %765 = vmatpush.msra.mxu0 0.0
  %766 = vmatpush.msra.mxu0 0.0
  %767 = vmatpush.msra.mxu0 0.0
  %768 = vmatpush.msra.mxu0 0.0
  %769 = vmatpush.msra.mxu0 0.0
  %770 = vmatpush.msra.mxu0 0.0
  %771 = vmatpush.msra.mxu0 0.0
  %772 = vmatpush.msra.mxu0 0.0
  %773 = vmatpush.msra.mxu0 0.0
  %774 = vmatpush.msra.mxu0 0.0
  %775 = vmatpush.msra.mxu0 0.0
  %776 = vmatpush.msra.mxu0 %v70
  %777 = vmatpush.msra.mxu0 %v69
  %778 = vmatpush.msra.mxu0 %v68
  %779 = vmatpush.msra.mxu0 %v67
  %780 = vmatmul.f32.gmra.mxu0 %v762
  %v781 = vpop.f32.mrf.mxu0
  %v782 = vadd.f32 0.0, %v781
  %783 = vdwg.mxu0
  %v785 = vrot.slane %v782, 4
  %v786 = vrot.slane %v782, 5
  %v789 = vadd.f32 %v62, %v785
  %v790 = vadd.f32 %v65, %v786
  %v791 = vtanh.pop %v789
  %v792 = vtanh.pop %v790
  %v793 = vxor.u32 %v789, 2147483648
  %v794 = vxor.u32 %v790, 2147483648
  %v795 = vmul.f32 %v793, 1.442695
  %v796 = vpow.pop %v795
  %v797 = vmul.f32 %v794, 1.442695
  %v798 = vpow.pop %v797
  %v799 = vadd.f32 %v796, 1.0
  %v800 = vadd.f32 %v798, 1.0
  %v801 = vrcp.pop %v799
  %v802 = vmul.f32 %v799, %v801
  %v803 = vsub.f32 1.0, %v802
  %v804 = vmul.f32 %v801, %v803
  %v805 = vadd.f32 %v801, %v804
  %vm806 = vweird.f32 %v799
  %vm807 = vweird.f32 %v801
  %vm808 = vmor %vm806, %vm807
  %v809 = vsel %vm808, %v801, %v805
  %v810 = vand.u32 2147483647, %v799
  %vm811 = vcmp.eq.f32.partialorder %v810, 8.507059e+37
  %v812 = vand.u32 %v799, 2147483648
  %v813 = vor.u32 1.1754944e-38, %v812
  %v814 = vsel %vm811, %v813, %v809
  %v815 = vmul.f32 1.0, %v814
  %v816 = vrcp.pop %v800
  %v817 = vmul.f32 %v800, %v816
  %v818 = vsub.f32 1.0, %v817
  %v819 = vmul.f32 %v816, %v818
  %v820 = vadd.f32 %v816, %v819
  %vm821 = vweird.f32 %v800
  %vm822 = vweird.f32 %v816
  %vm823 = vmor %vm821, %vm822
  %v824 = vsel %vm823, %v816, %v820
  %v825 = vand.u32 2147483647, %v800
  %vm826 = vcmp.eq.f32.partialorder %v825, 8.507059e+37
  %v827 = vand.u32 %v800, 2147483648
  %v828 = vor.u32 1.1754944e-38, %v827
  %v829 = vsel %vm826, %v828, %v824
  %v830 = vmul.f32 1.0, %v829
  %v833 = vrot.slane %v791, 4
  %v834 = vrot.slane %v792, 3
  %v835 = vsel %vm162, %v834, %v833
  %v839 = vrot.slane %v815, 4
  %v840 = vrot.slane %v830, 3
  %v841 = vsel %vm162, %v840, %v839
  %v843 = vsel %vm88, %v835, %v841
  %v844 = vmul.f32 %v843, %v685
  %846 = vrot.lane.b32.xlu0 %v843, 64
  %v847 = vpop.permute.xlu0 %846
  %v849 = vmul.f32 %v843, %v847
  %851 = vrot.lane.b32.xlu0 %v849, 32
  %v852 = vpop.permute.xlu0 %851
  %v854 = vadd.f32 %v844, %v852
  %v855 = vtanh.pop %v854
  %857 = vrot.lane.b32.xlu0 %v855, 64
  %v858 = vpop.permute.xlu0 %857
  %v860 = vmul.f32 %v843, %v858
  %862 = vrot.lane.b32.xlu0 %v860, 32
  %v863 = vpop.permute.xlu0 %862
  %866 = vrot.lane.b32.xlu0 %v761, 64
  %v867 = vpop.permute.xlu0 %866
  %v869 = vsel %vm89, %v863, %v867
  %v871 = vsel %vm196, %v869, 0
  %873 = vmatpush.msra.mxu0 0.0
  %874 = vmatpush.msra.mxu0 0.0
  %875 = vmatpush.msra.mxu0 0.0
  %876 = vmatpush.msra.mxu0 0.0
  %877 = vmatpush.msra.mxu0 0.0
  %878 = vmatpush.msra.mxu0 0.0
  %879 = vmatpush.msra.mxu0 0.0
  %880 = vmatpush.msra.mxu0 0.0
  %881 = vmatpush.msra.mxu0 %v78
  %882 = vmatpush.msra.mxu0 %v77
  %883 = vmatpush.msra.mxu0 %v76
  %884 = vmatpush.msra.mxu0 %v75
  %885 = vmatpush.msra.mxu0 %v74
  %886 = vmatpush.msra.mxu0 %v73
  %887 = vmatpush.msra.mxu0 %v72
  %888 = vmatpush.msra.mxu0 %v71
  %889 = vmatmul.f32.gmra.mxu0 %v871
  %v890 = vpop.f32.mrf.mxu0
  %v891 = vadd.f32 %v194, %v890
  %892 = vdwg.mxu0
  %v893 = vtanh.pop %v891
  %v894 = vxor.u32 %v891, 2147483648
  %v895 = vmul.f32 %v894, 1.442695
  %v896 = vpow.pop %v895
  %v897 = vadd.f32 %v896, 1.0
  %v898 = vrcp.pop %v897
  %v899 = vmul.f32 %v897, %v898
  %v900 = vsub.f32 1.0, %v899
  %v901 = vmul.f32 %v898, %v900
  %v902 = vadd.f32 %v898, %v901
  %vm903 = vweird.f32 %v897
  %vm904 = vweird.f32 %v898
  %vm905 = vmor %vm903, %vm904
  %v906 = vsel %vm905, %v898, %v902
  %v907 = vand.u32 2147483647, %v897
  %vm908 = vcmp.eq.f32.partialorder %v907, 8.507059e+37
  %v909 = vand.u32 %v897, 2147483648
  %v910 = vor.u32 1.1754944e-38, %v909
  %v911 = vsel %vm908, %v910, %v906
  %v912 = vmul.f32 1.0, %v911
  %v913 = vsel %vm88, %v893, %v912
  %v914 = vmul.f32 %v913, %v755
  %916 = vrot.lane.b32.xlu0 %v913, 64
  %v917 = vpop.permute.xlu0 %916
  %v919 = vmul.f32 %v913, %v917
  %921 = vrot.lane.b32.xlu0 %v919, 32
  %v922 = vpop.permute.xlu0 %921
  %v924 = vadd.f32 %v914, %v922
  %v925 = vtanh.pop %v924
  %927 = vrot.lane.b32.xlu0 %v925, 64
  %v928 = vpop.permute.xlu0 %927
  %v930 = vmul.f32 %v913, %v928
  %v931 = vsel %vm89, %v863, 0
  %933 = vmatpush.msra.mxu0 0.0
  %934 = vmatpush.msra.mxu0 0.0
  %935 = vmatpush.msra.mxu0 0.0
  %936 = vmatpush.msra.mxu0 0.0
  %937 = vmatpush.msra.mxu0 0.0
  %938 = vmatpush.msra.mxu0 0.0
  %939 = vmatpush.msra.mxu0 0.0
  %940 = vmatpush.msra.mxu0 0.0
  %941 = vmatpush.msra.mxu0 0.0
  %942 = vmatpush.msra.mxu0 0.0
  %943 = vmatpush.msra.mxu0 0.0
  %944 = vmatpush.msra.mxu0 0.0
  %945 = vmatpush.msra.mxu0 %v70
  %946 = vmatpush.msra.mxu0 %v69
  %947 = vmatpush.msra.mxu0 %v68
  %948 = vmatpush.msra.mxu0 %v67
  %949 = vmatmul.f32.gmra.mxu0 %v931
  %v950 = vpop.f32.mrf.mxu0
  %v951 = vadd.f32 0.0, %v950
  %952 = vdwg.mxu0
  %v954 = vrot.slane %v951, 3
  %v955 = vrot.slane %v951, 4
  %v958 = vadd.f32 %v62, %v954
  %v959 = vadd.f32 %v65, %v955
  %v960 = vtanh.pop %v958
  %v961 = vtanh.pop %v959
  %v962 = vxor.u32 %v958, 2147483648
  %v963 = vxor.u32 %v959, 2147483648
  %v964 = vmul.f32 %v962, 1.442695
  %v965 = vpow.pop %v964
  %v966 = vmul.f32 %v963, 1.442695
  %v967 = vpow.pop %v966
  %v968 = vadd.f32 %v965, 1.0
  %v969 = vadd.f32 %v967, 1.0
  %v970 = vrcp.pop %v968
  %v971 = vmul.f32 %v968, %v970
  %v972 = vsub.f32 1.0, %v971
  %v973 = vmul.f32 %v970, %v972
  %v974 = vadd.f32 %v970, %v973
  %vm975 = vweird.f32 %v968
  %vm976 = vweird.f32 %v970
  %vm977 = vmor %vm975, %vm976
  %v978 = vsel %vm977, %v970, %v974
  %v979 = vand.u32 2147483647, %v968
  %vm980 = vcmp.eq.f32.partialorder %v979, 8.507059e+37
  %v981 = vand.u32 %v968, 2147483648
  %v982 = vor.u32 1.1754944e-38, %v981
  %v983 = vsel %vm980, %v982, %v978
  %v984 = vmul.f32 1.0, %v983
  %v985 = vrcp.pop %v969
  %v986 = vmul.f32 %v969, %v985
  %v987 = vsub.f32 1.0, %v986
  %v988 = vmul.f32 %v985, %v987
  %v989 = vadd.f32 %v985, %v988
  %vm990 = vweird.f32 %v969
  %vm991 = vweird.f32 %v985
  %vm992 = vmor %vm990, %vm991
  %v993 = vsel %vm992, %v985, %v989
  %v994 = vand.u32 2147483647, %v969
  %vm995 = vcmp.eq.f32.partialorder %v994, 8.507059e+37
  %v996 = vand.u32 %v969, 2147483648
  %v997 = vor.u32 1.1754944e-38, %v996
  %v998 = vsel %vm995, %v997, %v993
  %v999 = vmul.f32 1.0, %v998
  %v1002 = vrot.slane %v960, 5
  %v1003 = vrot.slane %v961, 4
  %v1004 = vsel %vm162, %v1003, %v1002
  %v1008 = vrot.slane %v984, 5
  %v1009 = vrot.slane %v999, 4
  %v1010 = vsel %vm162, %v1009, %v1008
  %v1012 = vsel %vm88, %v1004, %v1010
  %v1013 = vmul.f32 %v1012, %v854
  %1015 = vrot.lane.b32.xlu0 %v1012, 64
  %v1016 = vpop.permute.xlu0 %1015
  %v1018 = vmul.f32 %v1012, %v1016
  %1020 = vrot.lane.b32.xlu0 %v1018, 32
  %v1021 = vpop.permute.xlu0 %1020
  %v1023 = vadd.f32 %v1013, %v1021
  %v1024 = vtanh.pop %v1023
  %1026 = vrot.lane.b32.xlu0 %v1024, 64
  %v1027 = vpop.permute.xlu0 %1026
  %v1029 = vmul.f32 %v1012, %v1027
  %1031 = vrot.lane.b32.xlu0 %v1029, 32
  %v1032 = vpop.permute.xlu0 %1031
  %1035 = vrot.lane.b32.xlu0 %v930, 64
  %v1036 = vpop.permute.xlu0 %1035
  %v1038 = vsel %vm89, %v1032, %v1036
  %v1040 = vsel %vm196, %v1038, 0
  %1042 = vmatpush.msra.mxu0 0.0
  %1043 = vmatpush.msra.mxu0 0.0
  %1044 = vmatpush.msra.mxu0 0.0
  %1045 = vmatpush.msra.mxu0 0.0
  %1046 = vmatpush.msra.mxu0 0.0
  %1047 = vmatpush.msra.mxu0 0.0
  %1048 = vmatpush.msra.mxu0 0.0
  %1049 = vmatpush.msra.mxu0 0.0
  %1050 = vmatpush.msra.mxu0 %v78
  %1051 = vmatpush.msra.mxu0 %v77
  %1052 = vmatpush.msra.mxu0 %v76
  %1053 = vmatpush.msra.mxu0 %v75
  %1054 = vmatpush.msra.mxu0 %v74
  %1055 = vmatpush.msra.mxu0 %v73
  %1056 = vmatpush.msra.mxu0 %v72
  %1057 = vmatpush.msra.mxu0 %v71
  %1058 = vmatmul.f32.gmra.mxu0 %v1040
  %v1059 = vpop.f32.mrf.mxu0
  %v1060 = vadd.f32 %v194, %v1059
  %1061 = vdwg.mxu0
  %v1062 = vtanh.pop %v1060
  %v1063 = vxor.u32 %v1060, 2147483648
  %v1064 = vmul.f32 %v1063, 1.442695
  %v1065 = vpow.pop %v1064
  %v1066 = vadd.f32 %v1065, 1.0
  %v1067 = vrcp.pop %v1066
  %v1068 = vmul.f32 %v1066, %v1067
  %v1069 = vsub.f32 1.0, %v1068
  %v1070 = vmul.f32 %v1067, %v1069
  %v1071 = vadd.f32 %v1067, %v1070
  %vm1072 = vweird.f32 %v1066
  %vm1073 = vweird.f32 %v1067
  %vm1074 = vmor %vm1072, %vm1073
  %v1075 = vsel %vm1074, %v1067, %v1071
  %v1076 = vand.u32 2147483647, %v1066
  %vm1077 = vcmp.eq.f32.partialorder %v1076, 8.507059e+37
  %v1078 = vand.u32 %v1066, 2147483648
  %v1079 = vor.u32 1.1754944e-38, %v1078
  %v1080 = vsel %vm1077, %v1079, %v1075
  %v1081 = vmul.f32 1.0, %v1080
  %v1082 = vsel %vm88, %v1062, %v1081
  %v1083 = vmul.f32 %v1082, %v924
  %1085 = vrot.lane.b32.xlu0 %v1082, 64
  %v1086 = vpop.permute.xlu0 %1085
  %v1088 = vmul.f32 %v1082, %v1086
  %1090 = vrot.lane.b32.xlu0 %v1088, 32
  %v1091 = vpop.permute.xlu0 %1090
  %v1093 = vadd.f32 %v1083, %v1091
  %v1094 = vtanh.pop %v1093
  %1096 = vrot.lane.b32.xlu0 %v1094, 64
  %v1097 = vpop.permute.xlu0 %1096
  %v1099 = vmul.f32 %v1082, %v1097
  %v1100 = vsel %vm89, %v1032, 0
  %1102 = vmatpush.msra.mxu0 0.0
  %1103 = vmatpush.msra.mxu0 0.0
  %1104 = vmatpush.msra.mxu0 0.0
  %1105 = vmatpush.msra.mxu0 0.0
  %1106 = vmatpush.msra.mxu0 0.0
  %1107 = vmatpush.msra.mxu0 0.0
  %1108 = vmatpush.msra.mxu0 0.0
  %1109 = vmatpush.msra.mxu0 0.0
  %1110 = vmatpush.msra.mxu0 0.0
  %1111 = vmatpush.msra.mxu0 0.0
  %1112 = vmatpush.msra.mxu0 0.0
  %1113 = vmatpush.msra.mxu0 0.0
  %1114 = vmatpush.msra.mxu0 %v70
  %1115 = vmatpush.msra.mxu0 %v69
  %1116 = vmatpush.msra.mxu0 %v68
  %1117 = vmatpush.msra.mxu0 %v67
  %1118 = vmatmul.f32.gmra.mxu0 %v1100
  %v1119 = vpop.f32.mrf.mxu0
  %v1120 = vadd.f32 0.0, %v1119
  %1121 = vdwg.mxu0
  %v1123 = vrot.slane %v1120, 2
  %v1124 = vrot.slane %v1120, 3
  %v1127 = vadd.f32 %v62, %v1123
  %v1128 = vadd.f32 %v65, %v1124
  %v1129 = vtanh.pop %v1127
  %v1130 = vtanh.pop %v1128
  %v1131 = vxor.u32 %v1127, 2147483648
  %v1132 = vxor.u32 %v1128, 2147483648
  %v1133 = vmul.f32 %v1131, 1.442695
  %v1134 = vpow.pop %v1133
  %v1135 = vmul.f32 %v1132, 1.442695
  %v1136 = vpow.pop %v1135
  %v1137 = vadd.f32 %v1134, 1.0
  %v1138 = vadd.f32 %v1136, 1.0
  %v1139 = vrcp.pop %v1137
  %v1140 = vmul.f32 %v1137, %v1139
  %v1141 = vsub.f32 1.0, %v1140
  %v1142 = vmul.f32 %v1139, %v1141
  %v1143 = vadd.f32 %v1139, %v1142
  %vm1144 = vweird.f32 %v1137
  %vm1145 = vweird.f32 %v1139
  %vm1146 = vmor %vm1144, %vm1145
  %v1147 = vsel %vm1146, %v1139, %v1143
  %v1148 = vand.u32 2147483647, %v1137
  %vm1149 = vcmp.eq.f32.partialorder %v1148, 8.507059e+37
  %v1150 = vand.u32 %v1137, 2147483648
  %v1151 = vor.u32 1.1754944e-38, %v1150
  %v1152 = vsel %vm1149, %v1151, %v1147
  %v1153 = vmul.f32 1.0, %v1152
  %v1154 = vrcp.pop %v1138
  %v1155 = vmul.f32 %v1138, %v1154
  %v1156 = vsub.f32 1.0, %v1155
  %v1157 = vmul.f32 %v1154, %v1156
  %v1158 = vadd.f32 %v1154, %v1157
  %vm1159 = vweird.f32 %v1138
  %vm1160 = vweird.f32 %v1154
  %vm1161 = vmor %vm1159, %vm1160
  %v1162 = vsel %vm1161, %v1154, %v1158
  %v1163 = vand.u32 2147483647, %v1138
  %vm1164 = vcmp.eq.f32.partialorder %v1163, 8.507059e+37
  %v1165 = vand.u32 %v1138, 2147483648
  %v1166 = vor.u32 1.1754944e-38, %v1165
  %v1167 = vsel %vm1164, %v1166, %v1162
  %v1168 = vmul.f32 1.0, %v1167
  %v1171 = vrot.slane %v1129, 6
  %v1172 = vrot.slane %v1130, 5
  %v1173 = vsel %vm162, %v1172, %v1171
  %v1177 = vrot.slane %v1153, 6
  %v1178 = vrot.slane %v1168, 5
  %v1179 = vsel %vm162, %v1178, %v1177
  %v1181 = vsel %vm88, %v1173, %v1179
  %v1182 = vmul.f32 %v1181, %v1023
  %1184 = vrot.lane.b32.xlu0 %v1181, 64
  %v1185 = vpop.permute.xlu0 %1184
  %v1187 = vmul.f32 %v1181, %v1185
  %1189 = vrot.lane.b32.xlu0 %v1187, 32
  %v1190 = vpop.permute.xlu0 %1189
  %v1192 = vadd.f32 %v1182, %v1190
  %v1193 = vtanh.pop %v1192
  %1195 = vrot.lane.b32.xlu0 %v1193, 64
  %v1196 = vpop.permute.xlu0 %1195
  %v1198 = vmul.f32 %v1181, %v1196
  %1200 = vrot.lane.b32.xlu0 %v1198, 32
  %v1201 = vpop.permute.xlu0 %1200
  %1204 = vrot.lane.b32.xlu0 %v1099, 64
  %v1205 = vpop.permute.xlu0 %1204
  %v1207 = vsel %vm89, %v1201, %v1205
  %v1209 = vsel %vm196, %v1207, 0
  %1211 = vmatpush.msra.mxu0 0.0
  %1212 = vmatpush.msra.mxu0 0.0
  %1213 = vmatpush.msra.mxu0 0.0
  %1214 = vmatpush.msra.mxu0 0.0
  %1215 = vmatpush.msra.mxu0 0.0
  %1216 = vmatpush.msra.mxu0 0.0
  %1217 = vmatpush.msra.mxu0 0.0
  %1218 = vmatpush.msra.mxu0 0.0
  %1219 = vmatpush.msra.mxu0 %v78
  %1220 = vmatpush.msra.mxu0 %v77
  %1221 = vmatpush.msra.mxu0 %v76
  %1222 = vmatpush.msra.mxu0 %v75
  %1223 = vmatpush.msra.mxu0 %v74
  %1224 = vmatpush.msra.mxu0 %v73
  %1225 = vmatpush.msra.mxu0 %v72
  %1226 = vmatpush.msra.mxu0 %v71
  %1227 = vmatmul.f32.gmra.mxu0 %v1209
  %v1228 = vpop.f32.mrf.mxu0
  %v1229 = vadd.f32 %v194, %v1228
  %1230 = vdwg.mxu0
  %v1231 = vtanh.pop %v1229
  %v1232 = vxor.u32 %v1229, 2147483648
  %v1233 = vmul.f32 %v1232, 1.442695
  %v1234 = vpow.pop %v1233
  %v1235 = vadd.f32 %v1234, 1.0
  %v1236 = vrcp.pop %v1235
  %v1237 = vmul.f32 %v1235, %v1236
  %v1238 = vsub.f32 1.0, %v1237
  %v1239 = vmul.f32 %v1236, %v1238
  %v1240 = vadd.f32 %v1236, %v1239
  %vm1241 = vweird.f32 %v1235
  %vm1242 = vweird.f32 %v1236
  %vm1243 = vmor %vm1241, %vm1242
  %v1244 = vsel %vm1243, %v1236, %v1240
  %v1245 = vand.u32 2147483647, %v1235
  %vm1246 = vcmp.eq.f32.partialorder %v1245, 8.507059e+37
  %v1247 = vand.u32 %v1235, 2147483648
  %v1248 = vor.u32 1.1754944e-38, %v1247
  %v1249 = vsel %vm1246, %v1248, %v1244
  %v1250 = vmul.f32 1.0, %v1249
  %v1251 = vsel %vm88, %v1231, %v1250
  %v1252 = vmul.f32 %v1251, %v1093
  %1254 = vrot.lane.b32.xlu0 %v1251, 64
  %v1255 = vpop.permute.xlu0 %1254
  %v1257 = vmul.f32 %v1251, %v1255
  %1259 = vrot.lane.b32.xlu0 %v1257, 32
  %v1260 = vpop.permute.xlu0 %1259
  %v1262 = vadd.f32 %v1252, %v1260
  %v1263 = vtanh.pop %v1262
  %1265 = vrot.lane.b32.xlu0 %v1263, 64
  %v1266 = vpop.permute.xlu0 %1265
  %v1268 = vmul.f32 %v1251, %v1266
  %v1269 = vsel %vm89, %v1201, 0
  %1271 = vmatpush.msra.mxu0 0.0
  %1272 = vmatpush.msra.mxu0 0.0
  %1273 = vmatpush.msra.mxu0 0.0
  %1274 = vmatpush.msra.mxu0 0.0
  %1275 = vmatpush.msra.mxu0 0.0
  %1276 = vmatpush.msra.mxu0 0.0
  %1277 = vmatpush.msra.mxu0 0.0
  %1278 = vmatpush.msra.mxu0 0.0
  %1279 = vmatpush.msra.mxu0 0.0
  %1280 = vmatpush.msra.mxu0 0.0
  %1281 = vmatpush.msra.mxu0 0.0
  %1282 = vmatpush.msra.mxu0 0.0
  %1283 = vmatpush.msra.mxu0 %v70
  %1284 = vmatpush.msra.mxu0 %v69
  %1285 = vmatpush.msra.mxu0 %v68
  %1286 = vmatpush.msra.mxu0 %v67
  %1287 = vmatmul.f32.gmra.mxu0 %v1269
  %v1288 = vpop.f32.mrf.mxu0
  %v1289 = vadd.f32 0.0, %v1288
  %1290 = vdwg.mxu0
  %v1292 = vrot.slane %v1289, 1
  %v1293 = vrot.slane %v1289, 2
  %v1296 = vadd.f32 %v62, %v1292
  %v1297 = vadd.f32 %v65, %v1293
  %v1298 = vtanh.pop %v1296
  %v1299 = vtanh.pop %v1297
  %v1300 = vxor.u32 %v1296, 2147483648
  %v1301 = vxor.u32 %v1297, 2147483648
  %v1302 = vmul.f32 %v1300, 1.442695
  %v1303 = vpow.pop %v1302
  %v1304 = vmul.f32 %v1301, 1.442695
  %v1305 = vpow.pop %v1304
  %v1306 = vadd.f32 %v1303, 1.0
  %v1307 = vadd.f32 %v1305, 1.0
  %v1308 = vrcp.pop %v1306
  %v1309 = vmul.f32 %v1306, %v1308
  %v1310 = vsub.f32 1.0, %v1309
  %v1311 = vmul.f32 %v1308, %v1310
  %v1312 = vadd.f32 %v1308, %v1311
  %vm1313 = vweird.f32 %v1306
  %vm1314 = vweird.f32 %v1308
  %vm1315 = vmor %vm1313, %vm1314
  %v1316 = vsel %vm1315, %v1308, %v1312
  %v1317 = vand.u32 2147483647, %v1306
  %vm1318 = vcmp.eq.f32.partialorder %v1317, 8.507059e+37
  %v1319 = vand.u32 %v1306, 2147483648
  %v1320 = vor.u32 1.1754944e-38, %v1319
  %v1321 = vsel %vm1318, %v1320, %v1316
  %v1322 = vmul.f32 1.0, %v1321
  %v1323 = vrcp.pop %v1307
  %v1324 = vmul.f32 %v1307, %v1323
  %v1325 = vsub.f32 1.0, %v1324
  %v1326 = vmul.f32 %v1323, %v1325
  %v1327 = vadd.f32 %v1323, %v1326
  %vm1328 = vweird.f32 %v1307
  %vm1329 = vweird.f32 %v1323
  %vm1330 = vmor %vm1328, %vm1329
  %v1331 = vsel %vm1330, %v1323, %v1327
  %v1332 = vand.u32 2147483647, %v1307
  %vm1333 = vcmp.eq.f32.partialorder %v1332, 8.507059e+37
  %v1334 = vand.u32 %v1307, 2147483648
  %v1335 = vor.u32 1.1754944e-38, %v1334
  %v1336 = vsel %vm1333, %v1335, %v1331
  %v1337 = vmul.f32 1.0, %v1336
  %v1340 = vrot.slane %v1298, 7
  %v1341 = vrot.slane %v1299, 6
  %v1342 = vsel %vm162, %v1341, %v1340
  %v1346 = vrot.slane %v1322, 7
  %v1347 = vrot.slane %v1337, 6
  %v1348 = vsel %vm162, %v1347, %v1346
  %v1350 = vsel %vm88, %v1342, %v1348
  %v1351 = vmul.f32 %v1350, %v1192
  %1353 = vrot.lane.b32.xlu0 %v1350, 64
  %v1354 = vpop.permute.xlu0 %1353
  %v1356 = vmul.f32 %v1350, %v1354
  %1358 = vrot.lane.b32.xlu0 %v1356, 32
  %v1359 = vpop.permute.xlu0 %1358
  %v1361 = vadd.f32 %v1351, %v1359
  %v1362 = vtanh.pop %v1361
  %1364 = vrot.lane.b32.xlu0 %v1362, 64
  %v1365 = vpop.permute.xlu0 %1364
  %v1367 = vmul.f32 %v1350, %v1365
  %1369 = vrot.lane.b32.xlu0 %v1367, 32
  %v1370 = vpop.permute.xlu0 %1369
  %1373 = vrot.lane.b32.xlu0 %v1268, 64
  %v1374 = vpop.permute.xlu0 %1373
  %v1376 = vsel %vm89, %v1370, %v1374
  %v1378 = vsel %vm196, %v1376, 0
  %1380 = vmatpush.msra.mxu0 0.0
  %1381 = vmatpush.msra.mxu0 0.0
  %1382 = vmatpush.msra.mxu0 0.0
  %1383 = vmatpush.msra.mxu0 0.0
  %1384 = vmatpush.msra.mxu0 0.0
  %1385 = vmatpush.msra.mxu0 0.0
  %1386 = vmatpush.msra.mxu0 0.0
  %1387 = vmatpush.msra.mxu0 0.0
  %1388 = vmatpush.msra.mxu0 %v78
  %1389 = vmatpush.msra.mxu0 %v77
  %1390 = vmatpush.msra.mxu0 %v76
  %1391 = vmatpush.msra.mxu0 %v75
  %1392 = vmatpush.msra.mxu0 %v74
  %1393 = vmatpush.msra.mxu0 %v73
  %1394 = vmatpush.msra.mxu0 %v72
  %1395 = vmatpush.msra.mxu0 %v71
  %1396 = vmatmul.f32.gmra.mxu0 %v1378
  %v1397 = vpop.f32.mrf.mxu0
  %v1398 = vadd.f32 %v194, %v1397
  %1399 = vdwg.mxu0
  %v1400 = vtanh.pop %v1398
  %v1401 = vxor.u32 %v1398, 2147483648
  %v1402 = vmul.f32 %v1401, 1.442695
  %v1403 = vpow.pop %v1402
  %v1404 = vadd.f32 %v1403, 1.0
  %v1405 = vrcp.pop %v1404
  %v1406 = vmul.f32 %v1404, %v1405
  %v1407 = vsub.f32 1.0, %v1406
  %v1408 = vmul.f32 %v1405, %v1407
  %v1409 = vadd.f32 %v1405, %v1408
  %vm1410 = vweird.f32 %v1404
  %vm1411 = vweird.f32 %v1405
  %vm1412 = vmor %vm1410, %vm1411
  %v1413 = vsel %vm1412, %v1405, %v1409
  %v1414 = vand.u32 2147483647, %v1404
  %vm1415 = vcmp.eq.f32.partialorder %v1414, 8.507059e+37
  %v1416 = vand.u32 %v1404, 2147483648
  %v1417 = vor.u32 1.1754944e-38, %v1416
  %v1418 = vsel %vm1415, %v1417, %v1413
  %v1419 = vmul.f32 1.0, %v1418
  %v1420 = vsel %vm88, %v1400, %v1419
  %v1421 = vmul.f32 %v1420, %v1262
  %1423 = vrot.lane.b32.xlu0 %v1420, 64
  %v1424 = vpop.permute.xlu0 %1423
  %v1426 = vmul.f32 %v1420, %v1424
  %1428 = vrot.lane.b32.xlu0 %v1426, 32
  %v1429 = vpop.permute.xlu0 %1428
  %v1431 = vadd.f32 %v1421, %v1429
  %v1432 = vtanh.pop %v1431
  %1434 = vrot.lane.b32.xlu0 %v1432, 64
  %v1435 = vpop.permute.xlu0 %1434
  %v1437 = vmul.f32 %v1420, %v1435
  %v1438 = vrot.slane %v257, 1
  %v1440 = vrot.slane %v423, 1
  %v1441 = vrot.slane %v592, 1
  %v1442 = vrot.slane %v761, 1
  %v1443 = vrot.slane %v930, 1
  %v1444 = vrot.slane %v1099, 1
  %v1445 = vrot.slane %v1268, 1
  %v1447 = vrot.slane %v1437, 1
  %v1448 = vperm.slane %v423, 0
  %v1449 = vperm.slane %v1440, 0
  %v1452 = vperm.slane %v592, 0
  %v1453 = vperm.slane %v1441, 0
  %v1456 = vperm.slane %v761, 0
  %v1457 = vperm.slane %v1442, 0
  %v1460 = vperm.slane %v930, 0
  %v1461 = vperm.slane %v1443, 0
  %v1464 = vperm.slane %v1099, 0
  %v1465 = vperm.slane %v1444, 0
  %v1468 = vperm.slane %v1268, 0
  %v1469 = vperm.slane %v1445, 0
  %v1472 = vperm.slane %v1437, 0
  %v1473 = vperm.slane %v1447, 0
  %vm1476 = vcmask 1040384
  %v1477 = vsel %vm1476, %v257, %v1448
  %v1478 = vsel %vm1476, %v1438, %v1449
  %vm1479 = vcmask 1041408
  %v1480 = vsel %vm1479, %v1477, %v1452
  %v1481 = vsel %vm1479, %v1478, %v1453
  %vm1482 = vcmask 1042432
  %v1483 = vsel %vm1482, %v1480, %v1456
  %v1484 = vsel %vm1482, %v1481, %v1457
  %v1485 = vsel %vm40, %v1483, %v1460
  %v1486 = vsel %vm40, %v1484, %v1461
  %vm1487 = vcmask 1044480
  %v1488 = vsel %vm1487, %v1485, %v1464
  %v1489 = vsel %vm1487, %v1486, %v1465
  %vm1490 = vcmask 1045504
  %v1491 = vsel %vm1490, %v1488, %v1468
  %v1492 = vsel %vm1490, %v1489, %v1469
  %vm1493 = vcmask 1046528
  %v1494 = vsel %vm1493, %v1491, %v1472
  %v1495 = vsel %vm1493, %v1492, %v1473
  %1498 = vrot.lane.b32.xlu0 %v1494, 32
  %v1499 = vpop.permute.xlu0 %1498
  %1500 = vrot.lane.b32.xlu0 %v1495, 32
  %v1501 = vpop.permute.xlu0 %1500
  %v1502 = vsel %vm89, %v1499, 0
  %v1504 = vsel %vm89, %v1501, 0
  %1506 = vmatpush.msra.mxu0 0.0
  %1507 = vmatpush.msra.mxu0 0.0
  %1508 = vmatpush.msra.mxu0 0.0
  %1509 = vmatpush.msra.mxu0 0.0
  %1510 = vmatpush.msra.mxu0 0.0
  %1511 = vmatpush.msra.mxu0 0.0
  %1512 = vmatpush.msra.mxu0 0.0
  %1513 = vmatpush.msra.mxu0 0.0
  %1514 = vmatpush.msra.mxu0 0.0
  %1515 = vmatpush.msra.mxu0 0.0
  %1516 = vmatpush.msra.mxu0 0.0
  %1517 = vmatpush.msra.mxu0 0.0
  %1518 = vmatpush.msra.mxu0 %v83
  %1519 = vmatpush.msra.mxu0 %v82
  %1520 = vmatpush.msra.mxu0 %v81
  %1521 = vmatpush.msra.mxu0 %v80
  %1522 = vmatmul.f32.gmra.mxu0 %v1502
  %v1523 = vpop.f32.mrf.mxu0
  %v1524 = vadd.f32 0.0, %v1523
  %1525 = vmatmul.f32.gmra.mxu0 %v1504
  %v1526 = vpop.f32.mrf.mxu0
  %v1527 = vadd.f32 0.0, %v1526
  %1528 = vdwg.mxu0
  %vm1529 = vcmask 23552
  %1530 = vst.msk [vmem:[%s7] sm:$0xff] %vm1529, %v1524
  %1531 = vst.msk [vmem:[%s7 + $0x8] sm:$0xff] %vm1529, %v1527
  // Predicated region
  $region30: #{custom_lstm_forward.1} parent=0 // pred_check
    _
  $region31: #{custom_lstm_forward.1} parent=0 // pred_check_branch
    %1533 = sbr.rel (0) target = $region33
  $region32: #{custom_lstm_forward.1} parent=0 // pred_region
    _
  $region33: #{custom_lstm_forward.1} parent=0 // pred_fallthru
    _
  // Predicated region
  $region34: #{custom_lstm_forward.1} parent=0 // pred_check
    _
  $region35: #{custom_lstm_forward.1} parent=0 // pred_check_branch
    %1535 = sbr.rel (0) target = $region37
  $region36: #{custom_lstm_forward.1} parent=0 // pred_region
    _
  $region37: #{custom_lstm_forward.1} parent=0 // pred_fallthru
    _

</llo_original>
